<compile_context>
chip_gen: v6e
topology: v6e:2x2x1
jax: 0.10.0
libtpu: 0.0.40
codegen_flags: <defaults>
</compile_context>

<pallas_src>
import jax
import jax.numpy as jnp
from jax.experimental import pallas as pl
from jax.experimental.pallas import tpu as pltpu


def _se_gate_kernel(gate_ref, x_ref, o_ref):
    # gate_ref: (TC, 1)   x_ref / o_ref: (TC, HW)
    # Sigmoid in f32 on the EUP; gate broadcasts along lanes (cheap).
    g = jax.nn.sigmoid(gate_ref[...].astype(jnp.float32))
    x = x_ref[...]
    if x.dtype == jnp.bfloat16:
        # Native bf16 VPU multiply on v6e/v7x; cast the (TC,1) gate once.
        o_ref[...] = (g.astype(jnp.bfloat16) * x).astype(o_ref.dtype)
    else:
        o_ref[...] = (g * x.astype(jnp.float32)).astype(o_ref.dtype)


def sigmoid_mul(gate_nchw, x_nchw, *, vmem_budget_bytes=32 * 1024 * 1024):
    """gate_nchw: (1, C, 1, 1), x_nchw: (1, C, H, W) -> sigmoid(gate) * x."""
    n, c, h, w = x_nchw.shape
    assert gate_nchw.shape == (n, c, 1, 1)
    assert n == 1, "kernel written for batch=1 (as in the reference module)"

    hw = h * w
    # Free, contiguous views (no data movement): channels on sublanes,
    # spatial on lanes.
    x2 = x_nchw.reshape(c, hw)      # (C, HW)
    g2 = gate_nchw.reshape(c, 1)    # (C, 1)

    itemsize = jnp.dtype(x_nchw.dtype).itemsize
    slab_bytes = c * hw * itemsize
    # ~25% headroom below the budget for gate buffer + internal scratch.
    usable = (vmem_budget_bytes * 3) // 4

    if 2 * slab_bytes <= usable:
        # Whole problem is VMEM-resident: single invocation, no grid, no
        # pipelining machinery / double-buffering.
        out = pl.pallas_call(
            _se_gate_kernel,
            out_shape=jax.ShapeDtypeStruct((c, hw), x_nchw.dtype),
            in_specs=[
                pl.BlockSpec(memory_space=pltpu.MemorySpace.VMEM),  # gate
                pl.BlockSpec(memory_space=pltpu.MemorySpace.VMEM),  # x
            ],
            out_specs=pl.BlockSpec(memory_space=pltpu.MemorySpace.VMEM),
        )(g2, x2)
    else:
        # Guardrail: tile channels (sublanes) in multiples of 8; keep the full
        # HW axis on lanes. Gate block follows the same channel index, so the
        # per-step sigmoid covers only the (tile_c, 1) slice it needs.
        per_row_bytes = 4 * hw * itemsize  # double-buffered in + out per channel row
        tile_c = max(8, min(c, (usable // per_row_bytes) // 8 * 8))
        grid = (pl.cdiv(c, tile_c),)
        out = pl.pallas_call(
            _se_gate_kernel,
            out_shape=jax.ShapeDtypeStruct((c, hw), x_nchw.dtype),
            grid=grid,
            in_specs=[
                pl.BlockSpec((tile_c, 1), lambda i: (i, 0)),
                pl.BlockSpec((tile_c, hw), lambda i: (i, 0)),
            ],
            out_specs=pl.BlockSpec((tile_c, hw), lambda i: (i, 0)),
            compiler_params=pltpu.CompilerParams(
                dimension_semantics=("arbitrary",),
                vmem_limit_bytes=vmem_budget_bytes,
            ),
        )(g2, x2)

    return out.reshape(n, c, h, w)


if __name__ == "__main__":
    key = jax.random.PRNGKey(0)
    k1, k2 = jax.random.split(key)

    # Shapes from the reference module: x490 = (1, 1200, 1, 1), x486 = (1, 1200, 7, 7)
    x490 = jax.random.normal(k1, (1, 1200, 1, 1), dtype=jnp.float32)
    x486 = jax.random.normal(k2, (1, 1200, 7, 7), dtype=jnp.float32)

    out = sigmoid_mul(x490, x486)
    out = jax.block_until_ready(out)

    # Reference check in plain JAX (tolerance valid for f32 inputs).
    ref = jax.nn.sigmoid(x490) * x486
    assert out.shape == ref.shape
    assert jnp.max(jnp.abs(out - ref)) < 1e-6

    print("KERNEL_OK")
</pallas_src>

<mosaic_0001>
module attributes {stable_mosaic.version = 11 : i64} {
  func.func @_se_gate_kernel(%arg0: memref<1200x1xf32, #tpu.memory_space<vmem>>, %arg1: memref<1200x49xf32, #tpu.memory_space<vmem>>, %arg2: memref<1200x49xf32, #tpu.memory_space<vmem>>) attributes {dimension_semantics = [], scalar_prefetch = 0 : i64, scratch_operands = 0 : i64, tpu.core_type = #tpu.core_type<tc>} {
    %c0 = arith.constant 0 : index
    %c0_0 = arith.constant 0 : index
    %0 = vector.load %arg0[%c0, %c0_0] : memref<1200x1xf32, #tpu.memory_space<vmem>>, vector<1200x1xf32>
    %1 = arith.negf %0 : vector<1200x1xf32>
    %2 = math.exp %1 : vector<1200x1xf32>
    %cst = arith.constant 1.000000e+00 : f32
    %3 = vector.broadcast %cst : f32 to vector<1200x1xf32>
    %4 = arith.addf %3, %2 : vector<1200x1xf32>
    %5 = arith.divf %3, %4 : vector<1200x1xf32>
    %c0_1 = arith.constant 0 : index
    %c0_2 = arith.constant 0 : index
    %6 = vector.load %arg1[%c0_1, %c0_2] : memref<1200x49xf32, #tpu.memory_space<vmem>>, vector<1200x49xf32>
    %7 = vector.broadcast %5 : vector<1200x1xf32> to vector<1200x49xf32>
    %8 = arith.mulf %7, %6 : vector<1200x49xf32>
    %c0_3 = arith.constant 0 : index
    %c0_4 = arith.constant 0 : index
    %9 = vector.load %arg2[%c0_3, %c0_4] : memref<1200x49xf32, #tpu.memory_space<vmem>>, vector<1200x49xf32>
    tpu.vector_store %arg2[%c0_3, %c0_4], %8 {strides = array<i32>} : memref<1200x49xf32, #tpu.memory_space<vmem>>, vector<1200x49xf32>,
    return
  }
}

</mosaic_0001>

<llo_original>
// kernel: tpu_custom_call.1
$region0: #{tpu_custom_call.1}
  #allocation0 [shape = 'u32[]', space=smem, size = 0x4, offset = 0x4, fixed_abs, tag = 'smem constant byte address 0x4 - core index']
  #allocation1 [shape = 'u32[144,128]{1,0:T(1,128)}', space=vmem, size = 0x12000, scoped, tag = 'internal scratch']
  %s0 = inlined_call_operand.vmem [shape: f32[1200,1], index: 0, kind: input, shape index: {}]
  %s1 = inlined_call_operand.vmem [shape: f32[1200,49], index: 1, kind: input, shape index: {}]
  %s2 = inlined_call_operand.vmem [shape: f32[1200,49], index: 2, kind: output, shape index: {}]
  %s3 = sld [smem:[#allocation0]]
  $region18: #{tpu_custom_call.1} parent=0
    _
  %s5 = ssub.s32 1, %s3
  %s6 = scalar_select 0, %s5, %s3
  // Predicated region
  $region2: #{tpu_custom_call.1} parent=0 // pred_check
    _
  $region3: #{tpu_custom_call.1} parent=0 // pred_check_branch
    %8 = sbr.rel (0) target = $region5
  $region4: #{tpu_custom_call.1} parent=0 // pred_region
    _
  $region5: #{tpu_custom_call.1} parent=0 // pred_fallthru
    _
  // Predicated region
  $region6: #{tpu_custom_call.1} parent=0 // pred_check
    _
  $region7: #{tpu_custom_call.1} parent=0 // pred_check_branch
    %10 = sbr.rel (0) target = $region9
  $region8: #{tpu_custom_call.1} parent=0 // pred_region
    _
  $region9: #{tpu_custom_call.1} parent=0 // pred_fallthru
    _
  %v11 = vld [vmem:[%s0] sm:$0xff]
  %v12 = vld [vmem:[%s0 + $0x8] sm:$0xff]
  %v13 = vld [vmem:[%s0 + $0x10] sm:$0xff]
  %v14 = vld [vmem:[%s0 + $0x18] sm:$0xff]
  %v15 = vld [vmem:[%s0 + $0x20] sm:$0xff]
  %v16 = vld [vmem:[%s0 + $0x28] sm:$0xff]
  %v17 = vld [vmem:[%s0 + $0x30] sm:$0xff]
  %v18 = vld [vmem:[%s0 + $0x38] sm:$0xff]
  %v19 = vld [vmem:[%s0 + $0x40] sm:$0xff]
  %v20 = vld [vmem:[%s0 + $0x48] sm:$0xff]
  %v21 = vld [vmem:[%s0 + $0x50] sm:$0xff]
  %v22 = vld [vmem:[%s0 + $0x58] sm:$0xff]
  %v23 = vld [vmem:[%s0 + $0x60] sm:$0xff]
  %v24 = vld [vmem:[%s0 + $0x68] sm:$0xff]
  %v25 = vld [vmem:[%s0 + $0x70] sm:$0xff]
  %v26 = vld [vmem:[%s0 + $0x78] sm:$0xff]
  %v27 = vld [vmem:[%s0 + $0x80] sm:$0xff]
  %v28 = vld [vmem:[%s0 + $0x88] sm:$0xff]
  %v29 = vld [vmem:[%s0 + $0x90] sm:$0xff]
  %v30 = vld [vmem:[%s0 + $0x98] sm:$0xff]
  %v31 = vld [vmem:[%s0 + $0xa0] sm:$0xff]
  %v32 = vld [vmem:[%s0 + $0xa8] sm:$0xff]
  %v33 = vld [vmem:[%s0 + $0xb0] sm:$0xff]
  %v34 = vld [vmem:[%s0 + $0xb8] sm:$0xff]
  %v35 = vld [vmem:[%s0 + $0xc0] sm:$0xff]
  %v36 = vld [vmem:[%s0 + $0xc8] sm:$0xff]
  %v37 = vld [vmem:[%s0 + $0xd0] sm:$0xff]
  %v38 = vld [vmem:[%s0 + $0xd8] sm:$0xff]
  %v39 = vld [vmem:[%s0 + $0xe0] sm:$0xff]
  %v40 = vld [vmem:[%s0 + $0xe8] sm:$0xff]
  %v41 = vld [vmem:[%s0 + $0xf0] sm:$0xff]
  %v42 = vld [vmem:[%s0 + $0xf8] sm:$0xff]
  %v43 = vld [vmem:[%s0 + $0x100] sm:$0xff]
  %v44 = vld [vmem:[%s0 + $0x108] sm:$0xff]
  %v45 = vld [vmem:[%s0 + $0x110] sm:$0xff]
  %v46 = vld [vmem:[%s0 + $0x118] sm:$0xff]
  %v47 = vld [vmem:[%s0 + $0x120] sm:$0xff]
  %v48 = vld [vmem:[%s0 + $0x128] sm:$0xff]
  %v49 = vld [vmem:[%s0 + $0x130] sm:$0xff]
  %v50 = vld [vmem:[%s0 + $0x138] sm:$0xff]
  %v51 = vld [vmem:[%s0 + $0x140] sm:$0xff]
  %v52 = vld [vmem:[%s0 + $0x148] sm:$0xff]
  %v53 = vld [vmem:[%s0 + $0x150] sm:$0xff]
  %v54 = vld [vmem:[%s0 + $0x158] sm:$0xff]
  %v55 = vld [vmem:[%s0 + $0x160] sm:$0xff]
  %v56 = vld [vmem:[%s0 + $0x168] sm:$0xff]
  %v57 = vld [vmem:[%s0 + $0x170] sm:$0xff]
  %v58 = vld [vmem:[%s0 + $0x178] sm:$0xff]
  %v59 = vld [vmem:[%s0 + $0x180] sm:$0xff]
  %v60 = vld [vmem:[%s0 + $0x188] sm:$0xff]
  %v61 = vld [vmem:[%s0 + $0x190] sm:$0xff]
  %v62 = vld [vmem:[%s0 + $0x198] sm:$0xff]
  %v63 = vld [vmem:[%s0 + $0x1a0] sm:$0xff]
  %v64 = vld [vmem:[%s0 + $0x1a8] sm:$0xff]
  %v65 = vld [vmem:[%s0 + $0x1b0] sm:$0xff]
  %v66 = vld [vmem:[%s0 + $0x1b8] sm:$0xff]
  %v67 = vld [vmem:[%s0 + $0x1c0] sm:$0xff]
  %v68 = vld [vmem:[%s0 + $0x1c8] sm:$0xff]
  %v69 = vld [vmem:[%s0 + $0x1d0] sm:$0xff]
  %v70 = vld [vmem:[%s0 + $0x1d8] sm:$0xff]
  %v71 = vld [vmem:[%s0 + $0x1e0] sm:$0xff]
  %v72 = vld [vmem:[%s0 + $0x1e8] sm:$0xff]
  %v73 = vld [vmem:[%s0 + $0x1f0] sm:$0xff]
  %v74 = vld [vmem:[%s0 + $0x1f8] sm:$0xff]
  %v75 = vld [vmem:[%s0 + $0x200] sm:$0xff]
  %v76 = vld [vmem:[%s0 + $0x208] sm:$0xff]
  %v77 = vld [vmem:[%s0 + $0x210] sm:$0xff]
  %v78 = vld [vmem:[%s0 + $0x218] sm:$0xff]
  %v79 = vld [vmem:[%s0 + $0x220] sm:$0xff]
  %v80 = vld [vmem:[%s0 + $0x228] sm:$0xff]
  %v81 = vld [vmem:[%s0 + $0x230] sm:$0xff]
  %v82 = vld [vmem:[%s0 + $0x238] sm:$0xff]
  %v83 = vld [vmem:[%s0 + $0x240] sm:$0xff]
  %v84 = vld [vmem:[%s0 + $0x248] sm:$0xff]
  %v85 = vld [vmem:[%s0 + $0x250] sm:$0xff]
  %v86 = vld [vmem:[%s0 + $0x258] sm:$0xff]
  %v87 = vld [vmem:[%s0 + $0x260] sm:$0xff]
  %v88 = vld [vmem:[%s0 + $0x268] sm:$0xff]
  %v89 = vld [vmem:[%s0 + $0x270] sm:$0xff]
  %v90 = vld [vmem:[%s0 + $0x278] sm:$0xff]
  %v91 = vld [vmem:[%s0 + $0x280] sm:$0xff]
  %v92 = vld [vmem:[%s0 + $0x288] sm:$0xff]
  %v93 = vld [vmem:[%s0 + $0x290] sm:$0xff]
  %v94 = vld [vmem:[%s0 + $0x298] sm:$0xff]
  %v95 = vld [vmem:[%s0 + $0x2a0] sm:$0xff]
  %v96 = vld [vmem:[%s0 + $0x2a8] sm:$0xff]
  %v97 = vld [vmem:[%s0 + $0x2b0] sm:$0xff]
  %v98 = vld [vmem:[%s0 + $0x2b8] sm:$0xff]
  %v99 = vld [vmem:[%s0 + $0x2c0] sm:$0xff]
  %v100 = vld [vmem:[%s0 + $0x2c8] sm:$0xff]
  %v101 = vld [vmem:[%s0 + $0x2d0] sm:$0xff]
  %v102 = vld [vmem:[%s0 + $0x2d8] sm:$0xff]
  %v103 = vld [vmem:[%s0 + $0x2e0] sm:$0xff]
  %v104 = vld [vmem:[%s0 + $0x2e8] sm:$0xff]
  %v105 = vld [vmem:[%s0 + $0x2f0] sm:$0xff]
  %v106 = vld [vmem:[%s0 + $0x2f8] sm:$0xff]
  %v107 = vld [vmem:[%s0 + $0x300] sm:$0xff]
  %v108 = vld [vmem:[%s0 + $0x308] sm:$0xff]
  %v109 = vld [vmem:[%s0 + $0x310] sm:$0xff]
  %v110 = vld [vmem:[%s0 + $0x318] sm:$0xff]
  %v111 = vld [vmem:[%s0 + $0x320] sm:$0xff]
  %v112 = vld [vmem:[%s0 + $0x328] sm:$0xff]
  %v113 = vld [vmem:[%s0 + $0x330] sm:$0xff]
  %v114 = vld [vmem:[%s0 + $0x338] sm:$0xff]
  %v115 = vld [vmem:[%s0 + $0x340] sm:$0xff]
  %v116 = vld [vmem:[%s0 + $0x348] sm:$0xff]
  %v117 = vld [vmem:[%s0 + $0x350] sm:$0xff]
  %v118 = vld [vmem:[%s0 + $0x358] sm:$0xff]
  %v119 = vld [vmem:[%s0 + $0x360] sm:$0xff]
  %v120 = vld [vmem:[%s0 + $0x368] sm:$0xff]
  %v121 = vld [vmem:[%s0 + $0x370] sm:$0xff]
  %v122 = vld [vmem:[%s0 + $0x378] sm:$0xff]
  %v123 = vld [vmem:[%s0 + $0x380] sm:$0xff]
  %v124 = vld [vmem:[%s0 + $0x388] sm:$0xff]
  %v125 = vld [vmem:[%s0 + $0x390] sm:$0xff]
  %v126 = vld [vmem:[%s0 + $0x398] sm:$0xff]
  %v127 = vld [vmem:[%s0 + $0x3a0] sm:$0xff]
  %v128 = vld [vmem:[%s0 + $0x3a8] sm:$0xff]
  %v129 = vld [vmem:[%s0 + $0x3b0] sm:$0xff]
  %v130 = vld [vmem:[%s0 + $0x3b8] sm:$0xff]
  %v131 = vld [vmem:[%s0 + $0x3c0] sm:$0xff]
  %v132 = vld [vmem:[%s0 + $0x3c8] sm:$0xff]
  %v133 = vld [vmem:[%s0 + $0x3d0] sm:$0xff]
  %v134 = vld [vmem:[%s0 + $0x3d8] sm:$0xff]
  %v135 = vld [vmem:[%s0 + $0x3e0] sm:$0xff]
  %v136 = vld [vmem:[%s0 + $0x3e8] sm:$0xff]
  %v137 = vld [vmem:[%s0 + $0x3f0] sm:$0xff]
  %v138 = vld [vmem:[%s0 + $0x3f8] sm:$0xff]
  %v139 = vld [vmem:[%s0 + $0x400] sm:$0xff]
  %v140 = vld [vmem:[%s0 + $0x408] sm:$0xff]
  %v141 = vld [vmem:[%s0 + $0x410] sm:$0xff]
  %v142 = vld [vmem:[%s0 + $0x418] sm:$0xff]
  %v143 = vld [vmem:[%s0 + $0x420] sm:$0xff]
  %v144 = vld [vmem:[%s0 + $0x428] sm:$0xff]
  %v145 = vld [vmem:[%s0 + $0x430] sm:$0xff]
  %v146 = vld [vmem:[%s0 + $0x438] sm:$0xff]
  %v147 = vld [vmem:[%s0 + $0x440] sm:$0xff]
  %v148 = vld [vmem:[%s0 + $0x448] sm:$0xff]
  %v149 = vld [vmem:[%s0 + $0x450] sm:$0xff]
  %v150 = vld [vmem:[%s0 + $0x458] sm:$0xff]
  %v151 = vld [vmem:[%s0 + $0x460] sm:$0xff]
  %v152 = vld [vmem:[%s0 + $0x468] sm:$0xff]
  %v153 = vld [vmem:[%s0 + $0x470] sm:$0xff]
  %v154 = vld [vmem:[%s0 + $0x478] sm:$0xff]
  %v155 = vld [vmem:[%s0 + $0x480] sm:$0xff]
  %v156 = vld [vmem:[%s0 + $0x488] sm:$0xff]
  %v157 = vld [vmem:[%s0 + $0x490] sm:$0xff]
  %v158 = vld [vmem:[%s0 + $0x498] sm:$0xff]
  %v159 = vld [vmem:[%s0 + $0x4a0] sm:$0xff]
  %v160 = vld [vmem:[%s0 + $0x4a8] sm:$0xff]
  %v161 = vxor.u32 %v11, 2147483648
  %v162 = vxor.u32 %v12, 2147483648
  %v163 = vxor.u32 %v13, 2147483648
  %v164 = vxor.u32 %v14, 2147483648
  %v165 = vxor.u32 %v15, 2147483648
  %v166 = vxor.u32 %v16, 2147483648
  %v167 = vxor.u32 %v17, 2147483648
  %v168 = vxor.u32 %v18, 2147483648
  %v169 = vxor.u32 %v19, 2147483648
  %v170 = vxor.u32 %v20, 2147483648
  %v171 = vxor.u32 %v21, 2147483648
  %v172 = vxor.u32 %v22, 2147483648
  %v173 = vxor.u32 %v23, 2147483648
  %v174 = vxor.u32 %v24, 2147483648
  %v175 = vxor.u32 %v25, 2147483648
  %v176 = vxor.u32 %v26, 2147483648
  %v177 = vxor.u32 %v27, 2147483648
  %v178 = vxor.u32 %v28, 2147483648
  %v179 = vxor.u32 %v29, 2147483648
  %v180 = vxor.u32 %v30, 2147483648
  %v181 = vxor.u32 %v31, 2147483648
  %v182 = vxor.u32 %v32, 2147483648
  %v183 = vxor.u32 %v33, 2147483648
  %v184 = vxor.u32 %v34, 2147483648
  %v185 = vxor.u32 %v35, 2147483648
  %v186 = vxor.u32 %v36, 2147483648
  %v187 = vxor.u32 %v37, 2147483648
  %v188 = vxor.u32 %v38, 2147483648
  %v189 = vxor.u32 %v39, 2147483648
  %v190 = vxor.u32 %v40, 2147483648
  %v191 = vxor.u32 %v41, 2147483648
  %v192 = vxor.u32 %v42, 2147483648
  %v193 = vxor.u32 %v43, 2147483648
  %v194 = vxor.u32 %v44, 2147483648
  %v195 = vxor.u32 %v45, 2147483648
  %v196 = vxor.u32 %v46, 2147483648
  %v197 = vxor.u32 %v47, 2147483648
  %v198 = vxor.u32 %v48, 2147483648
  %v199 = vxor.u32 %v49, 2147483648
  %v200 = vxor.u32 %v50, 2147483648
  %v201 = vxor.u32 %v51, 2147483648
  %v202 = vxor.u32 %v52, 2147483648
  %v203 = vxor.u32 %v53, 2147483648
  %v204 = vxor.u32 %v54, 2147483648
  %v205 = vxor.u32 %v55, 2147483648
  %v206 = vxor.u32 %v56, 2147483648
  %v207 = vxor.u32 %v57, 2147483648
  %v208 = vxor.u32 %v58, 2147483648
  %v209 = vxor.u32 %v59, 2147483648
  %v210 = vxor.u32 %v60, 2147483648
  %v211 = vxor.u32 %v61, 2147483648
  %v212 = vxor.u32 %v62, 2147483648
  %v213 = vxor.u32 %v63, 2147483648
  %v214 = vxor.u32 %v64, 2147483648
  %v215 = vxor.u32 %v65, 2147483648
  %v216 = vxor.u32 %v66, 2147483648
  %v217 = vxor.u32 %v67, 2147483648
  %v218 = vxor.u32 %v68, 2147483648
  %v219 = vxor.u32 %v69, 2147483648
  %v220 = vxor.u32 %v70, 2147483648
  %v221 = vxor.u32 %v71, 2147483648
  %v222 = vxor.u32 %v72, 2147483648
  %v223 = vxor.u32 %v73, 2147483648
  %v224 = vxor.u32 %v74, 2147483648
  %v225 = vxor.u32 %v75, 2147483648
  %v226 = vxor.u32 %v76, 2147483648
  %v227 = vxor.u32 %v77, 2147483648
  %v228 = vxor.u32 %v78, 2147483648
  %v229 = vxor.u32 %v79, 2147483648
  %v230 = vxor.u32 %v80, 2147483648
  %v231 = vxor.u32 %v81, 2147483648
  %v232 = vxor.u32 %v82, 2147483648
  %v233 = vxor.u32 %v83, 2147483648
  %v234 = vxor.u32 %v84, 2147483648
  %v235 = vxor.u32 %v85, 2147483648
  %v236 = vxor.u32 %v86, 2147483648
  %v237 = vxor.u32 %v87, 2147483648
  %v238 = vxor.u32 %v88, 2147483648
  %v239 = vxor.u32 %v89, 2147483648
  %v240 = vxor.u32 %v90, 2147483648
  %v241 = vxor.u32 %v91, 2147483648
  %v242 = vxor.u32 %v92, 2147483648
  %v243 = vxor.u32 %v93, 2147483648
  %v244 = vxor.u32 %v94, 2147483648
  %v245 = vxor.u32 %v95, 2147483648
  %v246 = vxor.u32 %v96, 2147483648
  %v247 = vxor.u32 %v97, 2147483648
  %v248 = vxor.u32 %v98, 2147483648
  %v249 = vxor.u32 %v99, 2147483648
  %v250 = vxor.u32 %v100, 2147483648
  %v251 = vxor.u32 %v101, 2147483648
  %v252 = vxor.u32 %v102, 2147483648
  %v253 = vxor.u32 %v103, 2147483648
  %v254 = vxor.u32 %v104, 2147483648
  %v255 = vxor.u32 %v105, 2147483648
  %v256 = vxor.u32 %v106, 2147483648
  %v257 = vxor.u32 %v107, 2147483648
  %v258 = vxor.u32 %v108, 2147483648
  %v259 = vxor.u32 %v109, 2147483648
  %v260 = vxor.u32 %v110, 2147483648
  %v261 = vxor.u32 %v111, 2147483648
  %v262 = vxor.u32 %v112, 2147483648
  %v263 = vxor.u32 %v113, 2147483648
  %v264 = vxor.u32 %v114, 2147483648
  %v265 = vxor.u32 %v115, 2147483648
  %v266 = vxor.u32 %v116, 2147483648
  %v267 = vxor.u32 %v117, 2147483648
  %v268 = vxor.u32 %v118, 2147483648
  %v269 = vxor.u32 %v119, 2147483648
  %v270 = vxor.u32 %v120, 2147483648
  %v271 = vxor.u32 %v121, 2147483648
  %v272 = vxor.u32 %v122, 2147483648
  %v273 = vxor.u32 %v123, 2147483648
  %v274 = vxor.u32 %v124, 2147483648
  %v275 = vxor.u32 %v125, 2147483648
  %v276 = vxor.u32 %v126, 2147483648
  %v277 = vxor.u32 %v127, 2147483648
  %v278 = vxor.u32 %v128, 2147483648
  %v279 = vxor.u32 %v129, 2147483648
  %v280 = vxor.u32 %v130, 2147483648
  %v281 = vxor.u32 %v131, 2147483648
  %v282 = vxor.u32 %v132, 2147483648
  %v283 = vxor.u32 %v133, 2147483648
  %v284 = vxor.u32 %v134, 2147483648
  %v285 = vxor.u32 %v135, 2147483648
  %v286 = vxor.u32 %v136, 2147483648
  %v287 = vxor.u32 %v137, 2147483648
  %v288 = vxor.u32 %v138, 2147483648
  %v289 = vxor.u32 %v139, 2147483648
  %v290 = vxor.u32 %v140, 2147483648
  %v291 = vxor.u32 %v141, 2147483648
  %v292 = vxor.u32 %v142, 2147483648
  %v293 = vxor.u32 %v143, 2147483648
  %v294 = vxor.u32 %v144, 2147483648
  %v295 = vxor.u32 %v145, 2147483648
  %v296 = vxor.u32 %v146, 2147483648
  %v297 = vxor.u32 %v147, 2147483648
  %v298 = vxor.u32 %v148, 2147483648
  %v299 = vxor.u32 %v149, 2147483648
  %v300 = vxor.u32 %v150, 2147483648
  %v301 = vxor.u32 %v151, 2147483648
  %v302 = vxor.u32 %v152, 2147483648
  %v303 = vxor.u32 %v153, 2147483648
  %v304 = vxor.u32 %v154, 2147483648
  %v305 = vxor.u32 %v155, 2147483648
  %v306 = vxor.u32 %v156, 2147483648
  %v307 = vxor.u32 %v157, 2147483648
  %v308 = vxor.u32 %v158, 2147483648
  %v309 = vxor.u32 %v159, 2147483648
  %v310 = vxor.u32 %v160, 2147483648
  %v311 = vmul.f32 %v161, 1.442695
  %v312 = vpow.pop %v311
  %v313 = vmul.f32 %v162, 1.442695
  %v314 = vpow.pop %v313
  %v315 = vmul.f32 %v163, 1.442695
  %v316 = vpow.pop %v315
  %v317 = vmul.f32 %v164, 1.442695
  %v318 = vpow.pop %v317
  %v319 = vmul.f32 %v165, 1.442695
  %v320 = vpow.pop %v319
  %v321 = vmul.f32 %v166, 1.442695
  %v322 = vpow.pop %v321
  %v323 = vmul.f32 %v167, 1.442695
  %v324 = vpow.pop %v323
  %v325 = vmul.f32 %v168, 1.442695
  %v326 = vpow.pop %v325
  %v327 = vmul.f32 %v169, 1.442695
  %v328 = vpow.pop %v327
  %v329 = vmul.f32 %v170, 1.442695
  %v330 = vpow.pop %v329
  %v331 = vmul.f32 %v171, 1.442695
  %v332 = vpow.pop %v331
  %v333 = vmul.f32 %v172, 1.442695
  %v334 = vpow.pop %v333
  %v335 = vmul.f32 %v173, 1.442695
  %v336 = vpow.pop %v335
  %v337 = vmul.f32 %v174, 1.442695
  %v338 = vpow.pop %v337
  %v339 = vmul.f32 %v175, 1.442695
  %v340 = vpow.pop %v339
  %v341 = vmul.f32 %v176, 1.442695
  %v342 = vpow.pop %v341
  %v343 = vmul.f32 %v177, 1.442695
  %v344 = vpow.pop %v343
  %v345 = vmul.f32 %v178, 1.442695
  %v346 = vpow.pop %v345
  %v347 = vmul.f32 %v179, 1.442695
  %v348 = vpow.pop %v347
  %v349 = vmul.f32 %v180, 1.442695
  %v350 = vpow.pop %v349
  %v351 = vmul.f32 %v181, 1.442695
  %v352 = vpow.pop %v351
  %v353 = vmul.f32 %v182, 1.442695
  %v354 = vpow.pop %v353
  %v355 = vmul.f32 %v183, 1.442695
  %v356 = vpow.pop %v355
  %v357 = vmul.f32 %v184, 1.442695
  %v358 = vpow.pop %v357
  %v359 = vmul.f32 %v185, 1.442695
  %v360 = vpow.pop %v359
  %v361 = vmul.f32 %v186, 1.442695
  %v362 = vpow.pop %v361
  %v363 = vmul.f32 %v187, 1.442695
  %v364 = vpow.pop %v363
  %v365 = vmul.f32 %v188, 1.442695
  %v366 = vpow.pop %v365
  %v367 = vmul.f32 %v189, 1.442695
  %v368 = vpow.pop %v367
  %v369 = vmul.f32 %v190, 1.442695
  %v370 = vpow.pop %v369
  %v371 = vmul.f32 %v191, 1.442695
  %v372 = vpow.pop %v371
  %v373 = vmul.f32 %v192, 1.442695
  %v374 = vpow.pop %v373
  %v375 = vmul.f32 %v193, 1.442695
  %v376 = vpow.pop %v375
  %v377 = vmul.f32 %v194, 1.442695
  %v378 = vpow.pop %v377
  %v379 = vmul.f32 %v195, 1.442695
  %v380 = vpow.pop %v379
  %v381 = vmul.f32 %v196, 1.442695
  %v382 = vpow.pop %v381
  %v383 = vmul.f32 %v197, 1.442695
  %v384 = vpow.pop %v383
  %v385 = vmul.f32 %v198, 1.442695
  %v386 = vpow.pop %v385
  %v387 = vmul.f32 %v199, 1.442695
  %v388 = vpow.pop %v387
  %v389 = vmul.f32 %v200, 1.442695
  %v390 = vpow.pop %v389
  %v391 = vmul.f32 %v201, 1.442695
  %v392 = vpow.pop %v391
  %v393 = vmul.f32 %v202, 1.442695
  %v394 = vpow.pop %v393
  %v395 = vmul.f32 %v203, 1.442695
  %v396 = vpow.pop %v395
  %v397 = vmul.f32 %v204, 1.442695
  %v398 = vpow.pop %v397
  %v399 = vmul.f32 %v205, 1.442695
  %v400 = vpow.pop %v399
  %v401 = vmul.f32 %v206, 1.442695
  %v402 = vpow.pop %v401
  %v403 = vmul.f32 %v207, 1.442695
  %v404 = vpow.pop %v403
  %v405 = vmul.f32 %v208, 1.442695
  %v406 = vpow.pop %v405
  %v407 = vmul.f32 %v209, 1.442695
  %v408 = vpow.pop %v407
  %v409 = vmul.f32 %v210, 1.442695
  %v410 = vpow.pop %v409
  %v411 = vmul.f32 %v211, 1.442695
  %v412 = vpow.pop %v411
  %v413 = vmul.f32 %v212, 1.442695
  %v414 = vpow.pop %v413
  %v415 = vmul.f32 %v213, 1.442695
  %v416 = vpow.pop %v415
  %v417 = vmul.f32 %v214, 1.442695
  %v418 = vpow.pop %v417
  %v419 = vmul.f32 %v215, 1.442695
  %v420 = vpow.pop %v419
  %v421 = vmul.f32 %v216, 1.442695
  %v422 = vpow.pop %v421
  %v423 = vmul.f32 %v217, 1.442695
  %v424 = vpow.pop %v423
  %v425 = vmul.f32 %v218, 1.442695
  %v426 = vpow.pop %v425
  %v427 = vmul.f32 %v219, 1.442695
  %v428 = vpow.pop %v427
  %v429 = vmul.f32 %v220, 1.442695
  %v430 = vpow.pop %v429
  %v431 = vmul.f32 %v221, 1.442695
  %v432 = vpow.pop %v431
  %v433 = vmul.f32 %v222, 1.442695
  %v434 = vpow.pop %v433
  %v435 = vmul.f32 %v223, 1.442695
  %v436 = vpow.pop %v435
  %v437 = vmul.f32 %v224, 1.442695
  %v438 = vpow.pop %v437
  %v439 = vmul.f32 %v225, 1.442695
  %v440 = vpow.pop %v439
  %v441 = vmul.f32 %v226, 1.442695
  %v442 = vpow.pop %v441
  %v443 = vmul.f32 %v227, 1.442695
  %v444 = vpow.pop %v443
  %v445 = vmul.f32 %v228, 1.442695
  %v446 = vpow.pop %v445
  %v447 = vmul.f32 %v229, 1.442695
  %v448 = vpow.pop %v447
  %v449 = vmul.f32 %v230, 1.442695
  %v450 = vpow.pop %v449
  %v451 = vmul.f32 %v231, 1.442695
  %v452 = vpow.pop %v451
  %v453 = vmul.f32 %v232, 1.442695
  %v454 = vpow.pop %v453
  %v455 = vmul.f32 %v233, 1.442695
  %v456 = vpow.pop %v455
  %v457 = vmul.f32 %v234, 1.442695
  %v458 = vpow.pop %v457
  %v459 = vmul.f32 %v235, 1.442695
  %v460 = vpow.pop %v459
  %v461 = vmul.f32 %v236, 1.442695
  %v462 = vpow.pop %v461
  %v463 = vmul.f32 %v237, 1.442695
  %v464 = vpow.pop %v463
  %v465 = vmul.f32 %v238, 1.442695
  %v466 = vpow.pop %v465
  %v467 = vmul.f32 %v239, 1.442695
  %v468 = vpow.pop %v467
  %v469 = vmul.f32 %v240, 1.442695
  %v470 = vpow.pop %v469
  %v471 = vmul.f32 %v241, 1.442695
  %v472 = vpow.pop %v471
  %v473 = vmul.f32 %v242, 1.442695
  %v474 = vpow.pop %v473
  %v475 = vmul.f32 %v243, 1.442695
  %v476 = vpow.pop %v475
  %v477 = vmul.f32 %v244, 1.442695
  %v478 = vpow.pop %v477
  %v479 = vmul.f32 %v245, 1.442695
  %v480 = vpow.pop %v479
  %v481 = vmul.f32 %v246, 1.442695
  %v482 = vpow.pop %v481
  %v483 = vmul.f32 %v247, 1.442695
  %v484 = vpow.pop %v483
  %v485 = vmul.f32 %v248, 1.442695
  %v486 = vpow.pop %v485
  %v487 = vmul.f32 %v249, 1.442695
  %v488 = vpow.pop %v487
  %v489 = vmul.f32 %v250, 1.442695
  %v490 = vpow.pop %v489
  %v491 = vmul.f32 %v251, 1.442695
  %v492 = vpow.pop %v491
  %v493 = vmul.f32 %v252, 1.442695
  %v494 = vpow.pop %v493
  %v495 = vmul.f32 %v253, 1.442695
  %v496 = vpow.pop %v495
  %v497 = vmul.f32 %v254, 1.442695
  %v498 = vpow.pop %v497
  %v499 = vmul.f32 %v255, 1.442695
  %v500 = vpow.pop %v499
  %v501 = vmul.f32 %v256, 1.442695
  %v502 = vpow.pop %v501
  %v503 = vmul.f32 %v257, 1.442695
  %v504 = vpow.pop %v503
  %v505 = vmul.f32 %v258, 1.442695
  %v506 = vpow.pop %v505
  %v507 = vmul.f32 %v259, 1.442695
  %v508 = vpow.pop %v507
  %v509 = vmul.f32 %v260, 1.442695
  %v510 = vpow.pop %v509
  %v511 = vmul.f32 %v261, 1.442695
  %v512 = vpow.pop %v511
  %v513 = vmul.f32 %v262, 1.442695
  %v514 = vpow.pop %v513
  %v515 = vmul.f32 %v263, 1.442695
  %v516 = vpow.pop %v515
  %v517 = vmul.f32 %v264, 1.442695
  %v518 = vpow.pop %v517
  %v519 = vmul.f32 %v265, 1.442695
  %v520 = vpow.pop %v519
  %v521 = vmul.f32 %v266, 1.442695
  %v522 = vpow.pop %v521
  %v523 = vmul.f32 %v267, 1.442695
  %v524 = vpow.pop %v523
  %v525 = vmul.f32 %v268, 1.442695
  %v526 = vpow.pop %v525
  %v527 = vmul.f32 %v269, 1.442695
  %v528 = vpow.pop %v527
  %v529 = vmul.f32 %v270, 1.442695
  %v530 = vpow.pop %v529
  %v531 = vmul.f32 %v271, 1.442695
  %v532 = vpow.pop %v531
  %v533 = vmul.f32 %v272, 1.442695
  %v534 = vpow.pop %v533
  %v535 = vmul.f32 %v273, 1.442695
  %v536 = vpow.pop %v535
  %v537 = vmul.f32 %v274, 1.442695
  %v538 = vpow.pop %v537
  %v539 = vmul.f32 %v275, 1.442695
  %v540 = vpow.pop %v539
  %v541 = vmul.f32 %v276, 1.442695
  %v542 = vpow.pop %v541
  %v543 = vmul.f32 %v277, 1.442695
  %v544 = vpow.pop %v543
  %v545 = vmul.f32 %v278, 1.442695
  %v546 = vpow.pop %v545
  %v547 = vmul.f32 %v279, 1.442695
  %v548 = vpow.pop %v547
  %v549 = vmul.f32 %v280, 1.442695
  %v550 = vpow.pop %v549
  %v551 = vmul.f32 %v281, 1.442695
  %v552 = vpow.pop %v551
  %v553 = vmul.f32 %v282, 1.442695
  %v554 = vpow.pop %v553
  %v555 = vmul.f32 %v283, 1.442695
  %v556 = vpow.pop %v555
  %v557 = vmul.f32 %v284, 1.442695
  %v558 = vpow.pop %v557
  %v559 = vmul.f32 %v285, 1.442695
  %v560 = vpow.pop %v559
  %v561 = vmul.f32 %v286, 1.442695
  %v562 = vpow.pop %v561
  %v563 = vmul.f32 %v287, 1.442695
  %v564 = vpow.pop %v563
  %v565 = vmul.f32 %v288, 1.442695
  %v566 = vpow.pop %v565
  %v567 = vmul.f32 %v289, 1.442695
  %v568 = vpow.pop %v567
  %v569 = vmul.f32 %v290, 1.442695
  %v570 = vpow.pop %v569
  %v571 = vmul.f32 %v291, 1.442695
  %v572 = vpow.pop %v571
  %v573 = vmul.f32 %v292, 1.442695
  %v574 = vpow.pop %v573
  %v575 = vmul.f32 %v293, 1.442695
  %v576 = vpow.pop %v575
  %v577 = vmul.f32 %v294, 1.442695
  %v578 = vpow.pop %v577
  %v579 = vmul.f32 %v295, 1.442695
  %v580 = vpow.pop %v579
  %v581 = vmul.f32 %v296, 1.442695
  %v582 = vpow.pop %v581
  %v583 = vmul.f32 %v297, 1.442695
  %v584 = vpow.pop %v583
  %v585 = vmul.f32 %v298, 1.442695
  %v586 = vpow.pop %v585
  %v587 = vmul.f32 %v299, 1.442695
  %v588 = vpow.pop %v587
  %v589 = vmul.f32 %v300, 1.442695
  %v590 = vpow.pop %v589
  %v591 = vmul.f32 %v301, 1.442695
  %v592 = vpow.pop %v591
  %v593 = vmul.f32 %v302, 1.442695
  %v594 = vpow.pop %v593
  %v595 = vmul.f32 %v303, 1.442695
  %v596 = vpow.pop %v595
  %v597 = vmul.f32 %v304, 1.442695
  %v598 = vpow.pop %v597
  %v599 = vmul.f32 %v305, 1.442695
  %v600 = vpow.pop %v599
  %v601 = vmul.f32 %v306, 1.442695
  %v602 = vpow.pop %v601
  %v603 = vmul.f32 %v307, 1.442695
  %v604 = vpow.pop %v603
  %v605 = vmul.f32 %v308, 1.442695
  %v606 = vpow.pop %v605
  %v607 = vmul.f32 %v309, 1.442695
  %v608 = vpow.pop %v607
  %v609 = vmul.f32 %v310, 1.442695
  %v610 = vpow.pop %v609
  %v611 = vadd.f32 %v312, 1.0
  %v612 = vadd.f32 %v314, 1.0
  %v613 = vadd.f32 %v316, 1.0
  %v614 = vadd.f32 %v318, 1.0
  %v615 = vadd.f32 %v320, 1.0
  %v616 = vadd.f32 %v322, 1.0
  %v617 = vadd.f32 %v324, 1.0
  %v618 = vadd.f32 %v326, 1.0
  %v619 = vadd.f32 %v328, 1.0
  %v620 = vadd.f32 %v330, 1.0
  %v621 = vadd.f32 %v332, 1.0
  %v622 = vadd.f32 %v334, 1.0
  %v623 = vadd.f32 %v336, 1.0
  %v624 = vadd.f32 %v338, 1.0
  %v625 = vadd.f32 %v340, 1.0
  %v626 = vadd.f32 %v342, 1.0
  %v627 = vadd.f32 %v344, 1.0
  %v628 = vadd.f32 %v346, 1.0
  %v629 = vadd.f32 %v348, 1.0
  %v630 = vadd.f32 %v350, 1.0
  %v631 = vadd.f32 %v352, 1.0
  %v632 = vadd.f32 %v354, 1.0
  %v633 = vadd.f32 %v356, 1.0
  %v634 = vadd.f32 %v358, 1.0
  %v635 = vadd.f32 %v360, 1.0
  %v636 = vadd.f32 %v362, 1.0
  %v637 = vadd.f32 %v364, 1.0
  %v638 = vadd.f32 %v366, 1.0
  %v639 = vadd.f32 %v368, 1.0
  %v640 = vadd.f32 %v370, 1.0
  %v641 = vadd.f32 %v372, 1.0
  %v642 = vadd.f32 %v374, 1.0
  %v643 = vadd.f32 %v376, 1.0
  %v644 = vadd.f32 %v378, 1.0
  %v645 = vadd.f32 %v380, 1.0
  %v646 = vadd.f32 %v382, 1.0
  %v647 = vadd.f32 %v384, 1.0
  %v648 = vadd.f32 %v386, 1.0
  %v649 = vadd.f32 %v388, 1.0
  %v650 = vadd.f32 %v390, 1.0
  %v651 = vadd.f32 %v392, 1.0
  %v652 = vadd.f32 %v394, 1.0
  %v653 = vadd.f32 %v396, 1.0
  %v654 = vadd.f32 %v398, 1.0
  %v655 = vadd.f32 %v400, 1.0
  %v656 = vadd.f32 %v402, 1.0
  %v657 = vadd.f32 %v404, 1.0
  %v658 = vadd.f32 %v406, 1.0
  %v659 = vadd.f32 %v408, 1.0
  %v660 = vadd.f32 %v410, 1.0
  %v661 = vadd.f32 %v412, 1.0
  %v662 = vadd.f32 %v414, 1.0
  %v663 = vadd.f32 %v416, 1.0
  %v664 = vadd.f32 %v418, 1.0
  %v665 = vadd.f32 %v420, 1.0
  %v666 = vadd.f32 %v422, 1.0
  %v667 = vadd.f32 %v424, 1.0
  %v668 = vadd.f32 %v426, 1.0
  %v669 = vadd.f32 %v428, 1.0
  %v670 = vadd.f32 %v430, 1.0
  %v671 = vadd.f32 %v432, 1.0
  %v672 = vadd.f32 %v434, 1.0
  %v673 = vadd.f32 %v436, 1.0
  %v674 = vadd.f32 %v438, 1.0
  %v675 = vadd.f32 %v440, 1.0
  %v676 = vadd.f32 %v442, 1.0
  %v677 = vadd.f32 %v444, 1.0
  %v678 = vadd.f32 %v446, 1.0
  %v679 = vadd.f32 %v448, 1.0
  %v680 = vadd.f32 %v450, 1.0
  %v681 = vadd.f32 %v452, 1.0
  %v682 = vadd.f32 %v454, 1.0
  %v683 = vadd.f32 %v456, 1.0
  %v684 = vadd.f32 %v458, 1.0
  %v685 = vadd.f32 %v460, 1.0
  %v686 = vadd.f32 %v462, 1.0
  %v687 = vadd.f32 %v464, 1.0
  %v688 = vadd.f32 %v466, 1.0
  %v689 = vadd.f32 %v468, 1.0
  %v690 = vadd.f32 %v470, 1.0
  %v691 = vadd.f32 %v472, 1.0
  %v692 = vadd.f32 %v474, 1.0
  %v693 = vadd.f32 %v476, 1.0
  %v694 = vadd.f32 %v478, 1.0
  %v695 = vadd.f32 %v480, 1.0
  %v696 = vadd.f32 %v482, 1.0
  %v697 = vadd.f32 %v484, 1.0
  %v698 = vadd.f32 %v486, 1.0
  %v699 = vadd.f32 %v488, 1.0
  %v700 = vadd.f32 %v490, 1.0
  %v701 = vadd.f32 %v492, 1.0
  %v702 = vadd.f32 %v494, 1.0
  %v703 = vadd.f32 %v496, 1.0
  %v704 = vadd.f32 %v498, 1.0
  %v705 = vadd.f32 %v500, 1.0
  %v706 = vadd.f32 %v502, 1.0
  %v707 = vadd.f32 %v504, 1.0
  %v708 = vadd.f32 %v506, 1.0
  %v709 = vadd.f32 %v508, 1.0
  %v710 = vadd.f32 %v510, 1.0
  %v711 = vadd.f32 %v512, 1.0
  %v712 = vadd.f32 %v514, 1.0
  %v713 = vadd.f32 %v516, 1.0
  %v714 = vadd.f32 %v518, 1.0
  %v715 = vadd.f32 %v520, 1.0
  %v716 = vadd.f32 %v522, 1.0
  %v717 = vadd.f32 %v524, 1.0
  %v718 = vadd.f32 %v526, 1.0
  %v719 = vadd.f32 %v528, 1.0
  %v720 = vadd.f32 %v530, 1.0
  %v721 = vadd.f32 %v532, 1.0
  %v722 = vadd.f32 %v534, 1.0
  %v723 = vadd.f32 %v536, 1.0
  %v724 = vadd.f32 %v538, 1.0
  %v725 = vadd.f32 %v540, 1.0
  %v726 = vadd.f32 %v542, 1.0
  %v727 = vadd.f32 %v544, 1.0
  %v728 = vadd.f32 %v546, 1.0
  %v729 = vadd.f32 %v548, 1.0
  %v730 = vadd.f32 %v550, 1.0
  %v731 = vadd.f32 %v552, 1.0
  %v732 = vadd.f32 %v554, 1.0
  %v733 = vadd.f32 %v556, 1.0
  %v734 = vadd.f32 %v558, 1.0
  %v735 = vadd.f32 %v560, 1.0
  %v736 = vadd.f32 %v562, 1.0
  %v737 = vadd.f32 %v564, 1.0
  %v738 = vadd.f32 %v566, 1.0
  %v739 = vadd.f32 %v568, 1.0
  %v740 = vadd.f32 %v570, 1.0
  %v741 = vadd.f32 %v572, 1.0
  %v742 = vadd.f32 %v574, 1.0
  %v743 = vadd.f32 %v576, 1.0
  %v744 = vadd.f32 %v578, 1.0
  %v745 = vadd.f32 %v580, 1.0
  %v746 = vadd.f32 %v582, 1.0
  %v747 = vadd.f32 %v584, 1.0
  %v748 = vadd.f32 %v586, 1.0
  %v749 = vadd.f32 %v588, 1.0
  %v750 = vadd.f32 %v590, 1.0
  %v751 = vadd.f32 %v592, 1.0
  %v752 = vadd.f32 %v594, 1.0
  %v753 = vadd.f32 %v596, 1.0
  %v754 = vadd.f32 %v598, 1.0
  %v755 = vadd.f32 %v600, 1.0
  %v756 = vadd.f32 %v602, 1.0
  %v757 = vadd.f32 %v604, 1.0
  %v758 = vadd.f32 %v606, 1.0
  %v759 = vadd.f32 %v608, 1.0
  %v760 = vadd.f32 %v610, 1.0
  %v761 = vrcp.pop %v611
  %v762 = vmul.f32 1.0, %v761
  %v763 = vrcp.pop %v612
  %v764 = vmul.f32 1.0, %v763
  %v765 = vrcp.pop %v613
  %v766 = vmul.f32 1.0, %v765
  %v767 = vrcp.pop %v614
  %v768 = vmul.f32 1.0, %v767
  %v769 = vrcp.pop %v615
  %v770 = vmul.f32 1.0, %v769
  %v771 = vrcp.pop %v616
  %v772 = vmul.f32 1.0, %v771
  %v773 = vrcp.pop %v617
  %v774 = vmul.f32 1.0, %v773
  %v775 = vrcp.pop %v618
  %v776 = vmul.f32 1.0, %v775
  %v777 = vrcp.pop %v619
  %v778 = vmul.f32 1.0, %v777
  %v779 = vrcp.pop %v620
  %v780 = vmul.f32 1.0, %v779
  %v781 = vrcp.pop %v621
  %v782 = vmul.f32 1.0, %v781
  %v783 = vrcp.pop %v622
  %v784 = vmul.f32 1.0, %v783
  %v785 = vrcp.pop %v623
  %v786 = vmul.f32 1.0, %v785
  %v787 = vrcp.pop %v624
  %v788 = vmul.f32 1.0, %v787
  %v789 = vrcp.pop %v625
  %v790 = vmul.f32 1.0, %v789
  %v791 = vrcp.pop %v626
  %v792 = vmul.f32 1.0, %v791
  %v793 = vrcp.pop %v627
  %v794 = vmul.f32 1.0, %v793
  %v795 = vrcp.pop %v628
  %v796 = vmul.f32 1.0, %v795
  %v797 = vrcp.pop %v629
  %v798 = vmul.f32 1.0, %v797
  %v799 = vrcp.pop %v630
  %v800 = vmul.f32 1.0, %v799
  %v801 = vrcp.pop %v631
  %v802 = vmul.f32 1.0, %v801
  %v803 = vrcp.pop %v632
  %v804 = vmul.f32 1.0, %v803
  %v805 = vrcp.pop %v633
  %v806 = vmul.f32 1.0, %v805
  %v807 = vrcp.pop %v634
  %v808 = vmul.f32 1.0, %v807
  %v809 = vrcp.pop %v635
  %v810 = vmul.f32 1.0, %v809
  %v811 = vrcp.pop %v636
  %v812 = vmul.f32 1.0, %v811
  %v813 = vrcp.pop %v637
  %v814 = vmul.f32 1.0, %v813
  %v815 = vrcp.pop %v638
  %v816 = vmul.f32 1.0, %v815
  %v817 = vrcp.pop %v639
  %v818 = vmul.f32 1.0, %v817
  %v819 = vrcp.pop %v640
  %v820 = vmul.f32 1.0, %v819
  %v821 = vrcp.pop %v641
  %v822 = vmul.f32 1.0, %v821
  %v823 = vrcp.pop %v642
  %v824 = vmul.f32 1.0, %v823
  %v825 = vrcp.pop %v643
  %v826 = vmul.f32 1.0, %v825
  %v827 = vrcp.pop %v644
  %v828 = vmul.f32 1.0, %v827
  %v829 = vrcp.pop %v645
  %v830 = vmul.f32 1.0, %v829
  %v831 = vrcp.pop %v646
  %v832 = vmul.f32 1.0, %v831
  %v833 = vrcp.pop %v647
  %v834 = vmul.f32 1.0, %v833
  %v835 = vrcp.pop %v648
  %v836 = vmul.f32 1.0, %v835
  %v837 = vrcp.pop %v649
  %v838 = vmul.f32 1.0, %v837
  %v839 = vrcp.pop %v650
  %v840 = vmul.f32 1.0, %v839
  %v841 = vrcp.pop %v651
  %v842 = vmul.f32 1.0, %v841
  %v843 = vrcp.pop %v652
  %v844 = vmul.f32 1.0, %v843
  %v845 = vrcp.pop %v653
  %v846 = vmul.f32 1.0, %v845
  %v847 = vrcp.pop %v654
  %v848 = vmul.f32 1.0, %v847
  %v849 = vrcp.pop %v655
  %v850 = vmul.f32 1.0, %v849
  %v851 = vrcp.pop %v656
  %v852 = vmul.f32 1.0, %v851
  %v853 = vrcp.pop %v657
  %v854 = vmul.f32 1.0, %v853
  %v855 = vrcp.pop %v658
  %v856 = vmul.f32 1.0, %v855
  %v857 = vrcp.pop %v659
  %v858 = vmul.f32 1.0, %v857
  %v859 = vrcp.pop %v660
  %v860 = vmul.f32 1.0, %v859
  %v861 = vrcp.pop %v661
  %v862 = vmul.f32 1.0, %v861
  %v863 = vrcp.pop %v662
  %v864 = vmul.f32 1.0, %v863
  %v865 = vrcp.pop %v663
  %v866 = vmul.f32 1.0, %v865
  %v867 = vrcp.pop %v664
  %v868 = vmul.f32 1.0, %v867
  %v869 = vrcp.pop %v665
  %v870 = vmul.f32 1.0, %v869
  %v871 = vrcp.pop %v666
  %v872 = vmul.f32 1.0, %v871
  %v873 = vrcp.pop %v667
  %v874 = vmul.f32 1.0, %v873
  %v875 = vrcp.pop %v668
  %v876 = vmul.f32 1.0, %v875
  %v877 = vrcp.pop %v669
  %v878 = vmul.f32 1.0, %v877
  %v879 = vrcp.pop %v670
  %v880 = vmul.f32 1.0, %v879
  %v881 = vrcp.pop %v671
  %v882 = vmul.f32 1.0, %v881
  %v883 = vrcp.pop %v672
  %v884 = vmul.f32 1.0, %v883
  %v885 = vrcp.pop %v673
  %v886 = vmul.f32 1.0, %v885
  %v887 = vrcp.pop %v674
  %v888 = vmul.f32 1.0, %v887
  %v889 = vrcp.pop %v675
  %v890 = vmul.f32 1.0, %v889
  %v891 = vrcp.pop %v676
  %v892 = vmul.f32 1.0, %v891
  %v893 = vrcp.pop %v677
  %v894 = vmul.f32 1.0, %v893
  %v895 = vrcp.pop %v678
  %v896 = vmul.f32 1.0, %v895
  %v897 = vrcp.pop %v679
  %v898 = vmul.f32 1.0, %v897
  %v899 = vrcp.pop %v680
  %v900 = vmul.f32 1.0, %v899
  %v901 = vrcp.pop %v681
  %v902 = vmul.f32 1.0, %v901
  %v903 = vrcp.pop %v682
  %v904 = vmul.f32 1.0, %v903
  %v905 = vrcp.pop %v683
  %v906 = vmul.f32 1.0, %v905
  %v907 = vrcp.pop %v684
  %v908 = vmul.f32 1.0, %v907
  %v909 = vrcp.pop %v685
  %v910 = vmul.f32 1.0, %v909
  %v911 = vrcp.pop %v686
  %v912 = vmul.f32 1.0, %v911
  %v913 = vrcp.pop %v687
  %v914 = vmul.f32 1.0, %v913
  %v915 = vrcp.pop %v688
  %v916 = vmul.f32 1.0, %v915
  %v917 = vrcp.pop %v689
  %v918 = vmul.f32 1.0, %v917
  %v919 = vrcp.pop %v690
  %v920 = vmul.f32 1.0, %v919
  %v921 = vrcp.pop %v691
  %v922 = vmul.f32 1.0, %v921
  %v923 = vrcp.pop %v692
  %v924 = vmul.f32 1.0, %v923
  %v925 = vrcp.pop %v693
  %v926 = vmul.f32 1.0, %v925
  %v927 = vrcp.pop %v694
  %v928 = vmul.f32 1.0, %v927
  %v929 = vrcp.pop %v695
  %v930 = vmul.f32 1.0, %v929
  %v931 = vrcp.pop %v696
  %v932 = vmul.f32 1.0, %v931
  %v933 = vrcp.pop %v697
  %v934 = vmul.f32 1.0, %v933
  %v935 = vrcp.pop %v698
  %v936 = vmul.f32 1.0, %v935
  %v937 = vrcp.pop %v699
  %v938 = vmul.f32 1.0, %v937
  %v939 = vrcp.pop %v700
  %v940 = vmul.f32 1.0, %v939
  %v941 = vrcp.pop %v701
  %v942 = vmul.f32 1.0, %v941
  %v943 = vrcp.pop %v702
  %v944 = vmul.f32 1.0, %v943
  %v945 = vrcp.pop %v703
  %v946 = vmul.f32 1.0, %v945
  %v947 = vrcp.pop %v704
  %v948 = vmul.f32 1.0, %v947
  %v949 = vrcp.pop %v705
  %v950 = vmul.f32 1.0, %v949
  %v951 = vrcp.pop %v706
  %v952 = vmul.f32 1.0, %v951
  %v953 = vrcp.pop %v707
  %v954 = vmul.f32 1.0, %v953
  %v955 = vrcp.pop %v708
  %v956 = vmul.f32 1.0, %v955
  %v957 = vrcp.pop %v709
  %v958 = vmul.f32 1.0, %v957
  %v959 = vrcp.pop %v710
  %v960 = vmul.f32 1.0, %v959
  %v961 = vrcp.pop %v711
  %v962 = vmul.f32 1.0, %v961
  %v963 = vrcp.pop %v712
  %v964 = vmul.f32 1.0, %v963
  %v965 = vrcp.pop %v713
  %v966 = vmul.f32 1.0, %v965
  %v967 = vrcp.pop %v714
  %v968 = vmul.f32 1.0, %v967
  %v969 = vrcp.pop %v715
  %v970 = vmul.f32 1.0, %v969
  %v971 = vrcp.pop %v716
  %v972 = vmul.f32 1.0, %v971
  %v973 = vrcp.pop %v717
  %v974 = vmul.f32 1.0, %v973
  %v975 = vrcp.pop %v718
  %v976 = vmul.f32 1.0, %v975
  %v977 = vrcp.pop %v719
  %v978 = vmul.f32 1.0, %v977
  %v979 = vrcp.pop %v720
  %v980 = vmul.f32 1.0, %v979
  %v981 = vrcp.pop %v721
  %v982 = vmul.f32 1.0, %v981
  %v983 = vrcp.pop %v722
  %v984 = vmul.f32 1.0, %v983
  %v985 = vrcp.pop %v723
  %v986 = vmul.f32 1.0, %v985
  %v987 = vrcp.pop %v724
  %v988 = vmul.f32 1.0, %v987
  %v989 = vrcp.pop %v725
  %v990 = vmul.f32 1.0, %v989
  %v991 = vrcp.pop %v726
  %v992 = vmul.f32 1.0, %v991
  %v993 = vrcp.pop %v727
  %v994 = vmul.f32 1.0, %v993
  %v995 = vrcp.pop %v728
  %v996 = vmul.f32 1.0, %v995
  %v997 = vrcp.pop %v729
  %v998 = vmul.f32 1.0, %v997
  %v999 = vrcp.pop %v730
  %v1000 = vmul.f32 1.0, %v999
  %v1001 = vrcp.pop %v731
  %v1002 = vmul.f32 1.0, %v1001
  %v1003 = vrcp.pop %v732
  %v1004 = vmul.f32 1.0, %v1003
  %v1005 = vrcp.pop %v733
  %v1006 = vmul.f32 1.0, %v1005
  %v1007 = vrcp.pop %v734
  %v1008 = vmul.f32 1.0, %v1007
  %v1009 = vrcp.pop %v735
  %v1010 = vmul.f32 1.0, %v1009
  %v1011 = vrcp.pop %v736
  %v1012 = vmul.f32 1.0, %v1011
  %v1013 = vrcp.pop %v737
  %v1014 = vmul.f32 1.0, %v1013
  %v1015 = vrcp.pop %v738
  %v1016 = vmul.f32 1.0, %v1015
  %v1017 = vrcp.pop %v739
  %v1018 = vmul.f32 1.0, %v1017
  %v1019 = vrcp.pop %v740
  %v1020 = vmul.f32 1.0, %v1019
  %v1021 = vrcp.pop %v741
  %v1022 = vmul.f32 1.0, %v1021
  %v1023 = vrcp.pop %v742
  %v1024 = vmul.f32 1.0, %v1023
  %v1025 = vrcp.pop %v743
  %v1026 = vmul.f32 1.0, %v1025
  %v1027 = vrcp.pop %v744
  %v1028 = vmul.f32 1.0, %v1027
  %v1029 = vrcp.pop %v745
  %v1030 = vmul.f32 1.0, %v1029
  %v1031 = vrcp.pop %v746
  %v1032 = vmul.f32 1.0, %v1031
  %v1033 = vrcp.pop %v747
  %v1034 = vmul.f32 1.0, %v1033
  %v1035 = vrcp.pop %v748
  %v1036 = vmul.f32 1.0, %v1035
  %v1037 = vrcp.pop %v749
  %v1038 = vmul.f32 1.0, %v1037
  %v1039 = vrcp.pop %v750
  %v1040 = vmul.f32 1.0, %v1039
  %v1041 = vrcp.pop %v751
  %v1042 = vmul.f32 1.0, %v1041
  %v1043 = vrcp.pop %v752
  %v1044 = vmul.f32 1.0, %v1043
  %v1045 = vrcp.pop %v753
  %v1046 = vmul.f32 1.0, %v1045
  %v1047 = vrcp.pop %v754
  %v1048 = vmul.f32 1.0, %v1047
  %v1049 = vrcp.pop %v755
  %v1050 = vmul.f32 1.0, %v1049
  %v1051 = vrcp.pop %v756
  %v1052 = vmul.f32 1.0, %v1051
  %v1053 = vrcp.pop %v757
  %v1054 = vmul.f32 1.0, %v1053
  %v1055 = vrcp.pop %v758
  %v1056 = vmul.f32 1.0, %v1055
  %v1057 = vrcp.pop %v759
  %v1058 = vmul.f32 1.0, %v1057
  %v1059 = vrcp.pop %v760
  %v1060 = vmul.f32 1.0, %v1059
  %v1061 = vld [vmem:[%s1] sm:$0xff]
  %v1062 = vld [vmem:[%s1 + $0x8] sm:$0xff]
  %v1063 = vld [vmem:[%s1 + $0x10] sm:$0xff]
  %v1064 = vld [vmem:[%s1 + $0x18] sm:$0xff]
  %v1065 = vld [vmem:[%s1 + $0x20] sm:$0xff]
  %v1066 = vld [vmem:[%s1 + $0x28] sm:$0xff]
  %v1067 = vld [vmem:[%s1 + $0x30] sm:$0xff]
  %v1068 = vld [vmem:[%s1 + $0x38] sm:$0xff]
  %v1069 = vld [vmem:[%s1 + $0x40] sm:$0xff]
  %v1070 = vld [vmem:[%s1 + $0x48] sm:$0xff]
  %v1071 = vld [vmem:[%s1 + $0x50] sm:$0xff]
  %v1072 = vld [vmem:[%s1 + $0x58] sm:$0xff]
  %v1073 = vld [vmem:[%s1 + $0x60] sm:$0xff]
  %v1074 = vld [vmem:[%s1 + $0x68] sm:$0xff]
  %v1075 = vld [vmem:[%s1 + $0x70] sm:$0xff]
  %v1076 = vld [vmem:[%s1 + $0x78] sm:$0xff]
  %v1077 = vld [vmem:[%s1 + $0x80] sm:$0xff]
  %v1078 = vld [vmem:[%s1 + $0x88] sm:$0xff]
  %v1079 = vld [vmem:[%s1 + $0x90] sm:$0xff]
  %v1080 = vld [vmem:[%s1 + $0x98] sm:$0xff]
  %v1081 = vld [vmem:[%s1 + $0xa0] sm:$0xff]
  %v1082 = vld [vmem:[%s1 + $0xa8] sm:$0xff]
  %v1083 = vld [vmem:[%s1 + $0xb0] sm:$0xff]
  %v1084 = vld [vmem:[%s1 + $0xb8] sm:$0xff]
  %v1085 = vld [vmem:[%s1 + $0xc0] sm:$0xff]
  %v1086 = vld [vmem:[%s1 + $0xc8] sm:$0xff]
  %v1087 = vld [vmem:[%s1 + $0xd0] sm:$0xff]
  %v1088 = vld [vmem:[%s1 + $0xd8] sm:$0xff]
  %v1089 = vld [vmem:[%s1 + $0xe0] sm:$0xff]
  %v1090 = vld [vmem:[%s1 + $0xe8] sm:$0xff]
  %v1091 = vld [vmem:[%s1 + $0xf0] sm:$0xff]
  %v1092 = vld [vmem:[%s1 + $0xf8] sm:$0xff]
  %v1093 = vld [vmem:[%s1 + $0x100] sm:$0xff]
  %v1094 = vld [vmem:[%s1 + $0x108] sm:$0xff]
  %v1095 = vld [vmem:[%s1 + $0x110] sm:$0xff]
  %v1096 = vld [vmem:[%s1 + $0x118] sm:$0xff]
  %v1097 = vld [vmem:[%s1 + $0x120] sm:$0xff]
  %v1098 = vld [vmem:[%s1 + $0x128] sm:$0xff]
  %v1099 = vld [vmem:[%s1 + $0x130] sm:$0xff]
  %v1100 = vld [vmem:[%s1 + $0x138] sm:$0xff]
  %v1101 = vld [vmem:[%s1 + $0x140] sm:$0xff]
  %v1102 = vld [vmem:[%s1 + $0x148] sm:$0xff]
  %v1103 = vld [vmem:[%s1 + $0x150] sm:$0xff]
  %v1104 = vld [vmem:[%s1 + $0x158] sm:$0xff]
  %v1105 = vld [vmem:[%s1 + $0x160] sm:$0xff]
  %v1106 = vld [vmem:[%s1 + $0x168] sm:$0xff]
  %v1107 = vld [vmem:[%s1 + $0x170] sm:$0xff]
  %v1108 = vld [vmem:[%s1 + $0x178] sm:$0xff]
  %v1109 = vld [vmem:[%s1 + $0x180] sm:$0xff]
  %v1110 = vld [vmem:[%s1 + $0x188] sm:$0xff]
  %v1111 = vld [vmem:[%s1 + $0x190] sm:$0xff]
  %v1112 = vld [vmem:[%s1 + $0x198] sm:$0xff]
  %v1113 = vld [vmem:[%s1 + $0x1a0] sm:$0xff]
  %v1114 = vld [vmem:[%s1 + $0x1a8] sm:$0xff]
  %v1115 = vld [vmem:[%s1 + $0x1b0] sm:$0xff]
  %v1116 = vld [vmem:[%s1 + $0x1b8] sm:$0xff]
  %v1117 = vld [vmem:[%s1 + $0x1c0] sm:$0xff]
  %v1118 = vld [vmem:[%s1 + $0x1c8] sm:$0xff]
  %v1119 = vld [vmem:[%s1 + $0x1d0] sm:$0xff]
  %v1120 = vld [vmem:[%s1 + $0x1d8] sm:$0xff]
  %v1121 = vld [vmem:[%s1 + $0x1e0] sm:$0xff]
  %v1122 = vld [vmem:[%s1 + $0x1e8] sm:$0xff]
  %v1123 = vld [vmem:[%s1 + $0x1f0] sm:$0xff]
  %v1124 = vld [vmem:[%s1 + $0x1f8] sm:$0xff]
  %v1125 = vld [vmem:[%s1 + $0x200] sm:$0xff]
  %v1126 = vld [vmem:[%s1 + $0x208] sm:$0xff]
  %v1127 = vld [vmem:[%s1 + $0x210] sm:$0xff]
  %v1128 = vld [vmem:[%s1 + $0x218] sm:$0xff]
  %v1129 = vld [vmem:[%s1 + $0x220] sm:$0xff]
  %v1130 = vld [vmem:[%s1 + $0x228] sm:$0xff]
  %v1131 = vld [vmem:[%s1 + $0x230] sm:$0xff]
  %v1132 = vld [vmem:[%s1 + $0x238] sm:$0xff]
  %v1133 = vld [vmem:[%s1 + $0x240] sm:$0xff]
  %v1134 = vld [vmem:[%s1 + $0x248] sm:$0xff]
  %v1135 = vld [vmem:[%s1 + $0x250] sm:$0xff]
  %v1136 = vld [vmem:[%s1 + $0x258] sm:$0xff]
  %v1137 = vld [vmem:[%s1 + $0x260] sm:$0xff]
  %v1138 = vld [vmem:[%s1 + $0x268] sm:$0xff]
  %v1139 = vld [vmem:[%s1 + $0x270] sm:$0xff]
  %v1140 = vld [vmem:[%s1 + $0x278] sm:$0xff]
  %v1141 = vld [vmem:[%s1 + $0x280] sm:$0xff]
  %v1142 = vld [vmem:[%s1 + $0x288] sm:$0xff]
  %v1143 = vld [vmem:[%s1 + $0x290] sm:$0xff]
  %v1144 = vld [vmem:[%s1 + $0x298] sm:$0xff]
  %v1145 = vld [vmem:[%s1 + $0x2a0] sm:$0xff]
  %v1146 = vld [vmem:[%s1 + $0x2a8] sm:$0xff]
  %v1147 = vld [vmem:[%s1 + $0x2b0] sm:$0xff]
  %v1148 = vld [vmem:[%s1 + $0x2b8] sm:$0xff]
  %v1149 = vld [vmem:[%s1 + $0x2c0] sm:$0xff]
  %v1150 = vld [vmem:[%s1 + $0x2c8] sm:$0xff]
  %v1151 = vld [vmem:[%s1 + $0x2d0] sm:$0xff]
  %v1152 = vld [vmem:[%s1 + $0x2d8] sm:$0xff]
  %v1153 = vld [vmem:[%s1 + $0x2e0] sm:$0xff]
  %v1154 = vld [vmem:[%s1 + $0x2e8] sm:$0xff]
  %v1155 = vld [vmem:[%s1 + $0x2f0] sm:$0xff]
  %v1156 = vld [vmem:[%s1 + $0x2f8] sm:$0xff]
  %v1157 = vld [vmem:[%s1 + $0x300] sm:$0xff]
  %v1158 = vld [vmem:[%s1 + $0x308] sm:$0xff]
  %v1159 = vld [vmem:[%s1 + $0x310] sm:$0xff]
  %v1160 = vld [vmem:[%s1 + $0x318] sm:$0xff]
  %v1161 = vld [vmem:[%s1 + $0x320] sm:$0xff]
  %v1162 = vld [vmem:[%s1 + $0x328] sm:$0xff]
  %v1163 = vld [vmem:[%s1 + $0x330] sm:$0xff]
  %v1164 = vld [vmem:[%s1 + $0x338] sm:$0xff]
  %v1165 = vld [vmem:[%s1 + $0x340] sm:$0xff]
  %v1166 = vld [vmem:[%s1 + $0x348] sm:$0xff]
  %v1167 = vld [vmem:[%s1 + $0x350] sm:$0xff]
  %v1168 = vld [vmem:[%s1 + $0x358] sm:$0xff]
  %v1169 = vld [vmem:[%s1 + $0x360] sm:$0xff]
  %v1170 = vld [vmem:[%s1 + $0x368] sm:$0xff]
  %v1171 = vld [vmem:[%s1 + $0x370] sm:$0xff]
  %v1172 = vld [vmem:[%s1 + $0x378] sm:$0xff]
  %v1173 = vld [vmem:[%s1 + $0x380] sm:$0xff]
  %v1174 = vld [vmem:[%s1 + $0x388] sm:$0xff]
  %v1175 = vld [vmem:[%s1 + $0x390] sm:$0xff]
  %v1176 = vld [vmem:[%s1 + $0x398] sm:$0xff]
  %v1177 = vld [vmem:[%s1 + $0x3a0] sm:$0xff]
  %v1178 = vld [vmem:[%s1 + $0x3a8] sm:$0xff]
  %v1179 = vld [vmem:[%s1 + $0x3b0] sm:$0xff]
  %v1180 = vld [vmem:[%s1 + $0x3b8] sm:$0xff]
  %v1181 = vld [vmem:[%s1 + $0x3c0] sm:$0xff]
  %v1182 = vld [vmem:[%s1 + $0x3c8] sm:$0xff]
  %v1183 = vld [vmem:[%s1 + $0x3d0] sm:$0xff]
  %v1184 = vld [vmem:[%s1 + $0x3d8] sm:$0xff]
  %v1185 = vld [vmem:[%s1 + $0x3e0] sm:$0xff]
  %v1186 = vld [vmem:[%s1 + $0x3e8] sm:$0xff]
  %v1187 = vld [vmem:[%s1 + $0x3f0] sm:$0xff]
  %v1188 = vld [vmem:[%s1 + $0x3f8] sm:$0xff]
  %v1189 = vld [vmem:[%s1 + $0x400] sm:$0xff]
  %v1190 = vld [vmem:[%s1 + $0x408] sm:$0xff]
  %v1191 = vld [vmem:[%s1 + $0x410] sm:$0xff]
  %v1192 = vld [vmem:[%s1 + $0x418] sm:$0xff]
  %v1193 = vld [vmem:[%s1 + $0x420] sm:$0xff]
  %v1194 = vld [vmem:[%s1 + $0x428] sm:$0xff]
  %v1195 = vld [vmem:[%s1 + $0x430] sm:$0xff]
  %v1196 = vld [vmem:[%s1 + $0x438] sm:$0xff]
  %v1197 = vld [vmem:[%s1 + $0x440] sm:$0xff]
  %v1198 = vld [vmem:[%s1 + $0x448] sm:$0xff]
  %v1199 = vld [vmem:[%s1 + $0x450] sm:$0xff]
  %v1200 = vld [vmem:[%s1 + $0x458] sm:$0xff]
  %v1201 = vld [vmem:[%s1 + $0x460] sm:$0xff]
  %v1202 = vld [vmem:[%s1 + $0x468] sm:$0xff]
  %v1203 = vld [vmem:[%s1 + $0x470] sm:$0xff]
  %v1204 = vld [vmem:[%s1 + $0x478] sm:$0xff]
  %v1205 = vld [vmem:[%s1 + $0x480] sm:$0xff]
  %v1206 = vld [vmem:[%s1 + $0x488] sm:$0xff]
  %v1207 = vld [vmem:[%s1 + $0x490] sm:$0xff]
  %v1208 = vld [vmem:[%s1 + $0x498] sm:$0xff]
  %v1209 = vld [vmem:[%s1 + $0x4a0] sm:$0xff]
  %v1210 = vld [vmem:[%s1 + $0x4a8] sm:$0xff]
  %1212 = vset.pattern.permute.xlu0 0
  %1213 = vperm.xlu0 %1212, %v762
  %v1214 = vpop.permute.xlu0 %1213
  %1217 = vset.pattern.permute.xlu0 0
  %1218 = vperm.xlu0 %1217, %v764
  %v1219 = vpop.permute.xlu0 %1218
  %1222 = vset.pattern.permute.xlu0 0
  %1223 = vperm.xlu0 %1222, %v766
  %v1224 = vpop.permute.xlu0 %1223
  %1227 = vset.pattern.permute.xlu0 0
  %1228 = vperm.xlu0 %1227, %v768
  %v1229 = vpop.permute.xlu0 %1228
  %1232 = vset.pattern.permute.xlu0 0
  %1233 = vperm.xlu0 %1232, %v770
  %v1234 = vpop.permute.xlu0 %1233
  %1237 = vset.pattern.permute.xlu0 0
  %1238 = vperm.xlu0 %1237, %v772
  %v1239 = vpop.permute.xlu0 %1238
  %1242 = vset.pattern.permute.xlu0 0
  %1243 = vperm.xlu0 %1242, %v774
  %v1244 = vpop.permute.xlu0 %1243
  %1247 = vset.pattern.permute.xlu0 0
  %1248 = vperm.xlu0 %1247, %v776
  %v1249 = vpop.permute.xlu0 %1248
  %1252 = vset.pattern.permute.xlu0 0
  %1253 = vperm.xlu0 %1252, %v778
  %v1254 = vpop.permute.xlu0 %1253
  %1257 = vset.pattern.permute.xlu0 0
  %1258 = vperm.xlu0 %1257, %v780
  %v1259 = vpop.permute.xlu0 %1258
  %1262 = vset.pattern.permute.xlu0 0
  %1263 = vperm.xlu0 %1262, %v782
  %v1264 = vpop.permute.xlu0 %1263
  %1267 = vset.pattern.permute.xlu0 0
  %1268 = vperm.xlu0 %1267, %v784
  %v1269 = vpop.permute.xlu0 %1268
  %1272 = vset.pattern.permute.xlu0 0
  %1273 = vperm.xlu0 %1272, %v786
  %v1274 = vpop.permute.xlu0 %1273
  %1277 = vset.pattern.permute.xlu0 0
  %1278 = vperm.xlu0 %1277, %v788
  %v1279 = vpop.permute.xlu0 %1278
  %1282 = vset.pattern.permute.xlu0 0
  %1283 = vperm.xlu0 %1282, %v790
  %v1284 = vpop.permute.xlu0 %1283
  %1287 = vset.pattern.permute.xlu0 0
  %1288 = vperm.xlu0 %1287, %v792
  %v1289 = vpop.permute.xlu0 %1288
  %1292 = vset.pattern.permute.xlu0 0
  %1293 = vperm.xlu0 %1292, %v794
  %v1294 = vpop.permute.xlu0 %1293
  %1297 = vset.pattern.permute.xlu0 0
  %1298 = vperm.xlu0 %1297, %v796
  %v1299 = vpop.permute.xlu0 %1298
  %1302 = vset.pattern.permute.xlu0 0
  %1303 = vperm.xlu0 %1302, %v798
  %v1304 = vpop.permute.xlu0 %1303
  %1307 = vset.pattern.permute.xlu0 0
  %1308 = vperm.xlu0 %1307, %v800
  %v1309 = vpop.permute.xlu0 %1308
  %1312 = vset.pattern.permute.xlu0 0
  %1313 = vperm.xlu0 %1312, %v802
  %v1314 = vpop.permute.xlu0 %1313
  %1317 = vset.pattern.permute.xlu0 0
  %1318 = vperm.xlu0 %1317, %v804
  %v1319 = vpop.permute.xlu0 %1318
  %1322 = vset.pattern.permute.xlu0 0
  %1323 = vperm.xlu0 %1322, %v806
  %v1324 = vpop.permute.xlu0 %1323
  %1327 = vset.pattern.permute.xlu0 0
  %1328 = vperm.xlu0 %1327, %v808
  %v1329 = vpop.permute.xlu0 %1328
  %1332 = vset.pattern.permute.xlu0 0
  %1333 = vperm.xlu0 %1332, %v810
  %v1334 = vpop.permute.xlu0 %1333
  %1337 = vset.pattern.permute.xlu0 0
  %1338 = vperm.xlu0 %1337, %v812
  %v1339 = vpop.permute.xlu0 %1338
  %1342 = vset.pattern.permute.xlu0 0
  %1343 = vperm.xlu0 %1342, %v814
  %v1344 = vpop.permute.xlu0 %1343
  %1347 = vset.pattern.permute.xlu0 0
  %1348 = vperm.xlu0 %1347, %v816
  %v1349 = vpop.permute.xlu0 %1348
  %1352 = vset.pattern.permute.xlu0 0
  %1353 = vperm.xlu0 %1352, %v818
  %v1354 = vpop.permute.xlu0 %1353
  %1357 = vset.pattern.permute.xlu0 0
  %1358 = vperm.xlu0 %1357, %v820
  %v1359 = vpop.permute.xlu0 %1358
  %1362 = vset.pattern.permute.xlu0 0
  %1363 = vperm.xlu0 %1362, %v822
  %v1364 = vpop.permute.xlu0 %1363
  %1367 = vset.pattern.permute.xlu0 0
  %1368 = vperm.xlu0 %1367, %v824
  %v1369 = vpop.permute.xlu0 %1368
  %1372 = vset.pattern.permute.xlu0 0
  %1373 = vperm.xlu0 %1372, %v826
  %v1374 = vpop.permute.xlu0 %1373
  %1377 = vset.pattern.permute.xlu0 0
  %1378 = vperm.xlu0 %1377, %v828
  %v1379 = vpop.permute.xlu0 %1378
  %1382 = vset.pattern.permute.xlu0 0
  %1383 = vperm.xlu0 %1382, %v830
  %v1384 = vpop.permute.xlu0 %1383
  %1387 = vset.pattern.permute.xlu0 0
  %1388 = vperm.xlu0 %1387, %v832
  %v1389 = vpop.permute.xlu0 %1388
  %1392 = vset.pattern.permute.xlu0 0
  %1393 = vperm.xlu0 %1392, %v834
  %v1394 = vpop.permute.xlu0 %1393
  %1397 = vset.pattern.permute.xlu0 0
  %1398 = vperm.xlu0 %1397, %v836
  %v1399 = vpop.permute.xlu0 %1398
  %1402 = vset.pattern.permute.xlu0 0
  %1403 = vperm.xlu0 %1402, %v838
  %v1404 = vpop.permute.xlu0 %1403
  %1407 = vset.pattern.permute.xlu0 0
  %1408 = vperm.xlu0 %1407, %v840
  %v1409 = vpop.permute.xlu0 %1408
  %1412 = vset.pattern.permute.xlu0 0
  %1413 = vperm.xlu0 %1412, %v842
  %v1414 = vpop.permute.xlu0 %1413
  %1417 = vset.pattern.permute.xlu0 0
  %1418 = vperm.xlu0 %1417, %v844
  %v1419 = vpop.permute.xlu0 %1418
  %1422 = vset.pattern.permute.xlu0 0
  %1423 = vperm.xlu0 %1422, %v846
  %v1424 = vpop.permute.xlu0 %1423
  %1427 = vset.pattern.permute.xlu0 0
  %1428 = vperm.xlu0 %1427, %v848
  %v1429 = vpop.permute.xlu0 %1428
  %1432 = vset.pattern.permute.xlu0 0
  %1433 = vperm.xlu0 %1432, %v850
  %v1434 = vpop.permute.xlu0 %1433
  %1437 = vset.pattern.permute.xlu0 0
  %1438 = vperm.xlu0 %1437, %v852
  %v1439 = vpop.permute.xlu0 %1438
  %1442 = vset.pattern.permute.xlu0 0
  %1443 = vperm.xlu0 %1442, %v854
  %v1444 = vpop.permute.xlu0 %1443
  %1447 = vset.pattern.permute.xlu0 0
  %1448 = vperm.xlu0 %1447, %v856
  %v1449 = vpop.permute.xlu0 %1448
  %1452 = vset.pattern.permute.xlu0 0
  %1453 = vperm.xlu0 %1452, %v858
  %v1454 = vpop.permute.xlu0 %1453
  %1457 = vset.pattern.permute.xlu0 0
  %1458 = vperm.xlu0 %1457, %v860
  %v1459 = vpop.permute.xlu0 %1458
  %1462 = vset.pattern.permute.xlu0 0
  %1463 = vperm.xlu0 %1462, %v862
  %v1464 = vpop.permute.xlu0 %1463
  %1467 = vset.pattern.permute.xlu0 0
  %1468 = vperm.xlu0 %1467, %v864
  %v1469 = vpop.permute.xlu0 %1468
  %1472 = vset.pattern.permute.xlu0 0
  %1473 = vperm.xlu0 %1472, %v866
  %v1474 = vpop.permute.xlu0 %1473
  %1477 = vset.pattern.permute.xlu0 0
  %1478 = vperm.xlu0 %1477, %v868
  %v1479 = vpop.permute.xlu0 %1478
  %1482 = vset.pattern.permute.xlu0 0
  %1483 = vperm.xlu0 %1482, %v870
  %v1484 = vpop.permute.xlu0 %1483
  %1487 = vset.pattern.permute.xlu0 0
  %1488 = vperm.xlu0 %1487, %v872
  %v1489 = vpop.permute.xlu0 %1488
  %1492 = vset.pattern.permute.xlu0 0
  %1493 = vperm.xlu0 %1492, %v874
  %v1494 = vpop.permute.xlu0 %1493
  %1497 = vset.pattern.permute.xlu0 0
  %1498 = vperm.xlu0 %1497, %v876
  %v1499 = vpop.permute.xlu0 %1498
  %1502 = vset.pattern.permute.xlu0 0
  %1503 = vperm.xlu0 %1502, %v878
  %v1504 = vpop.permute.xlu0 %1503
  %1507 = vset.pattern.permute.xlu0 0
  %1508 = vperm.xlu0 %1507, %v880
  %v1509 = vpop.permute.xlu0 %1508
  %1512 = vset.pattern.permute.xlu0 0
  %1513 = vperm.xlu0 %1512, %v882
  %v1514 = vpop.permute.xlu0 %1513
  %1517 = vset.pattern.permute.xlu0 0
  %1518 = vperm.xlu0 %1517, %v884
  %v1519 = vpop.permute.xlu0 %1518
  %1522 = vset.pattern.permute.xlu0 0
  %1523 = vperm.xlu0 %1522, %v886
  %v1524 = vpop.permute.xlu0 %1523
  %1527 = vset.pattern.permute.xlu0 0
  %1528 = vperm.xlu0 %1527, %v888
  %v1529 = vpop.permute.xlu0 %1528
  %1532 = vset.pattern.permute.xlu0 0
  %1533 = vperm.xlu0 %1532, %v890
  %v1534 = vpop.permute.xlu0 %1533
  %1537 = vset.pattern.permute.xlu0 0
  %1538 = vperm.xlu0 %1537, %v892
  %v1539 = vpop.permute.xlu0 %1538
  %1542 = vset.pattern.permute.xlu0 0
  %1543 = vperm.xlu0 %1542, %v894
  %v1544 = vpop.permute.xlu0 %1543
  %1547 = vset.pattern.permute.xlu0 0
  %1548 = vperm.xlu0 %1547, %v896
  %v1549 = vpop.permute.xlu0 %1548
  %1552 = vset.pattern.permute.xlu0 0
  %1553 = vperm.xlu0 %1552, %v898
  %v1554 = vpop.permute.xlu0 %1553
  %1557 = vset.pattern.permute.xlu0 0
  %1558 = vperm.xlu0 %1557, %v900
  %v1559 = vpop.permute.xlu0 %1558
  %1562 = vset.pattern.permute.xlu0 0
  %1563 = vperm.xlu0 %1562, %v902
  %v1564 = vpop.permute.xlu0 %1563
  %1567 = vset.pattern.permute.xlu0 0
  %1568 = vperm.xlu0 %1567, %v904
  %v1569 = vpop.permute.xlu0 %1568
  %1572 = vset.pattern.permute.xlu0 0
  %1573 = vperm.xlu0 %1572, %v906
  %v1574 = vpop.permute.xlu0 %1573
  %1577 = vset.pattern.permute.xlu0 0
  %1578 = vperm.xlu0 %1577, %v908
  %v1579 = vpop.permute.xlu0 %1578
  %1582 = vset.pattern.permute.xlu0 0
  %1583 = vperm.xlu0 %1582, %v910
  %v1584 = vpop.permute.xlu0 %1583
  %1587 = vset.pattern.permute.xlu0 0
  %1588 = vperm.xlu0 %1587, %v912
  %v1589 = vpop.permute.xlu0 %1588
  %1592 = vset.pattern.permute.xlu0 0
  %1593 = vperm.xlu0 %1592, %v914
  %v1594 = vpop.permute.xlu0 %1593
  %1597 = vset.pattern.permute.xlu0 0
  %1598 = vperm.xlu0 %1597, %v916
  %v1599 = vpop.permute.xlu0 %1598
  %1602 = vset.pattern.permute.xlu0 0
  %1603 = vperm.xlu0 %1602, %v918
  %v1604 = vpop.permute.xlu0 %1603
  %1607 = vset.pattern.permute.xlu0 0
  %1608 = vperm.xlu0 %1607, %v920
  %v1609 = vpop.permute.xlu0 %1608
  %1612 = vset.pattern.permute.xlu0 0
  %1613 = vperm.xlu0 %1612, %v922
  %v1614 = vpop.permute.xlu0 %1613
  %1617 = vset.pattern.permute.xlu0 0
  %1618 = vperm.xlu0 %1617, %v924
  %v1619 = vpop.permute.xlu0 %1618
  %1622 = vset.pattern.permute.xlu0 0
  %1623 = vperm.xlu0 %1622, %v926
  %v1624 = vpop.permute.xlu0 %1623
  %1627 = vset.pattern.permute.xlu0 0
  %1628 = vperm.xlu0 %1627, %v928
  %v1629 = vpop.permute.xlu0 %1628
  %1632 = vset.pattern.permute.xlu0 0
  %1633 = vperm.xlu0 %1632, %v930
  %v1634 = vpop.permute.xlu0 %1633
  %1637 = vset.pattern.permute.xlu0 0
  %1638 = vperm.xlu0 %1637, %v932
  %v1639 = vpop.permute.xlu0 %1638
  %1642 = vset.pattern.permute.xlu0 0
  %1643 = vperm.xlu0 %1642, %v934
  %v1644 = vpop.permute.xlu0 %1643
  %1647 = vset.pattern.permute.xlu0 0
  %1648 = vperm.xlu0 %1647, %v936
  %v1649 = vpop.permute.xlu0 %1648
  %1652 = vset.pattern.permute.xlu0 0
  %1653 = vperm.xlu0 %1652, %v938
  %v1654 = vpop.permute.xlu0 %1653
  %1657 = vset.pattern.permute.xlu0 0
  %1658 = vperm.xlu0 %1657, %v940
  %v1659 = vpop.permute.xlu0 %1658
  %1662 = vset.pattern.permute.xlu0 0
  %1663 = vperm.xlu0 %1662, %v942
  %v1664 = vpop.permute.xlu0 %1663
  %1667 = vset.pattern.permute.xlu0 0
  %1668 = vperm.xlu0 %1667, %v944
  %v1669 = vpop.permute.xlu0 %1668
  %1672 = vset.pattern.permute.xlu0 0
  %1673 = vperm.xlu0 %1672, %v946
  %v1674 = vpop.permute.xlu0 %1673
  %1677 = vset.pattern.permute.xlu0 0
  %1678 = vperm.xlu0 %1677, %v948
  %v1679 = vpop.permute.xlu0 %1678
  %1682 = vset.pattern.permute.xlu0 0
  %1683 = vperm.xlu0 %1682, %v950
  %v1684 = vpop.permute.xlu0 %1683
  %1687 = vset.pattern.permute.xlu0 0
  %1688 = vperm.xlu0 %1687, %v952
  %v1689 = vpop.permute.xlu0 %1688
  %1692 = vset.pattern.permute.xlu0 0
  %1693 = vperm.xlu0 %1692, %v954
  %v1694 = vpop.permute.xlu0 %1693
  %1697 = vset.pattern.permute.xlu0 0
  %1698 = vperm.xlu0 %1697, %v956
  %v1699 = vpop.permute.xlu0 %1698
  %1702 = vset.pattern.permute.xlu0 0
  %1703 = vperm.xlu0 %1702, %v958
  %v1704 = vpop.permute.xlu0 %1703
  %1707 = vset.pattern.permute.xlu0 0
  %1708 = vperm.xlu0 %1707, %v960
  %v1709 = vpop.permute.xlu0 %1708
  %1712 = vset.pattern.permute.xlu0 0
  %1713 = vperm.xlu0 %1712, %v962
  %v1714 = vpop.permute.xlu0 %1713
  %1717 = vset.pattern.permute.xlu0 0
  %1718 = vperm.xlu0 %1717, %v964
  %v1719 = vpop.permute.xlu0 %1718
  %1722 = vset.pattern.permute.xlu0 0
  %1723 = vperm.xlu0 %1722, %v966
  %v1724 = vpop.permute.xlu0 %1723
  %1727 = vset.pattern.permute.xlu0 0
  %1728 = vperm.xlu0 %1727, %v968
  %v1729 = vpop.permute.xlu0 %1728
  %1732 = vset.pattern.permute.xlu0 0
  %1733 = vperm.xlu0 %1732, %v970
  %v1734 = vpop.permute.xlu0 %1733
  %1737 = vset.pattern.permute.xlu0 0
  %1738 = vperm.xlu0 %1737, %v972
  %v1739 = vpop.permute.xlu0 %1738
  %1742 = vset.pattern.permute.xlu0 0
  %1743 = vperm.xlu0 %1742, %v974
  %v1744 = vpop.permute.xlu0 %1743
  %1747 = vset.pattern.permute.xlu0 0
  %1748 = vperm.xlu0 %1747, %v976
  %v1749 = vpop.permute.xlu0 %1748
  %1752 = vset.pattern.permute.xlu0 0
  %1753 = vperm.xlu0 %1752, %v978
  %v1754 = vpop.permute.xlu0 %1753
  %1757 = vset.pattern.permute.xlu0 0
  %1758 = vperm.xlu0 %1757, %v980
  %v1759 = vpop.permute.xlu0 %1758
  %1762 = vset.pattern.permute.xlu0 0
  %1763 = vperm.xlu0 %1762, %v982
  %v1764 = vpop.permute.xlu0 %1763
  %1767 = vset.pattern.permute.xlu0 0
  %1768 = vperm.xlu0 %1767, %v984
  %v1769 = vpop.permute.xlu0 %1768
  %1772 = vset.pattern.permute.xlu0 0
  %1773 = vperm.xlu0 %1772, %v986
  %v1774 = vpop.permute.xlu0 %1773
  %1777 = vset.pattern.permute.xlu0 0
  %1778 = vperm.xlu0 %1777, %v988
  %v1779 = vpop.permute.xlu0 %1778
  %1782 = vset.pattern.permute.xlu0 0
  %1783 = vperm.xlu0 %1782, %v990
  %v1784 = vpop.permute.xlu0 %1783
  %1787 = vset.pattern.permute.xlu0 0
  %1788 = vperm.xlu0 %1787, %v992
  %v1789 = vpop.permute.xlu0 %1788
  %1792 = vset.pattern.permute.xlu0 0
  %1793 = vperm.xlu0 %1792, %v994
  %v1794 = vpop.permute.xlu0 %1793
  %1797 = vset.pattern.permute.xlu0 0
  %1798 = vperm.xlu0 %1797, %v996
  %v1799 = vpop.permute.xlu0 %1798
  %1802 = vset.pattern.permute.xlu0 0
  %1803 = vperm.xlu0 %1802, %v998
  %v1804 = vpop.permute.xlu0 %1803
  %1807 = vset.pattern.permute.xlu0 0
  %1808 = vperm.xlu0 %1807, %v1000
  %v1809 = vpop.permute.xlu0 %1808
  %1812 = vset.pattern.permute.xlu0 0
  %1813 = vperm.xlu0 %1812, %v1002
  %v1814 = vpop.permute.xlu0 %1813
  %1817 = vset.pattern.permute.xlu0 0
  %1818 = vperm.xlu0 %1817, %v1004
  %v1819 = vpop.permute.xlu0 %1818
  %1822 = vset.pattern.permute.xlu0 0
  %1823 = vperm.xlu0 %1822, %v1006
  %v1824 = vpop.permute.xlu0 %1823
  %1827 = vset.pattern.permute.xlu0 0
  %1828 = vperm.xlu0 %1827, %v1008
  %v1829 = vpop.permute.xlu0 %1828
  %1832 = vset.pattern.permute.xlu0 0
  %1833 = vperm.xlu0 %1832, %v1010
  %v1834 = vpop.permute.xlu0 %1833
  %1837 = vset.pattern.permute.xlu0 0
  %1838 = vperm.xlu0 %1837, %v1012
  %v1839 = vpop.permute.xlu0 %1838
  %1842 = vset.pattern.permute.xlu0 0
  %1843 = vperm.xlu0 %1842, %v1014
  %v1844 = vpop.permute.xlu0 %1843
  %1847 = vset.pattern.permute.xlu0 0
  %1848 = vperm.xlu0 %1847, %v1016
  %v1849 = vpop.permute.xlu0 %1848
  %1852 = vset.pattern.permute.xlu0 0
  %1853 = vperm.xlu0 %1852, %v1018
  %v1854 = vpop.permute.xlu0 %1853
  %1857 = vset.pattern.permute.xlu0 0
  %1858 = vperm.xlu0 %1857, %v1020
  %v1859 = vpop.permute.xlu0 %1858
  %1862 = vset.pattern.permute.xlu0 0
  %1863 = vperm.xlu0 %1862, %v1022
  %v1864 = vpop.permute.xlu0 %1863
  %1867 = vset.pattern.permute.xlu0 0
  %1868 = vperm.xlu0 %1867, %v1024
  %v1869 = vpop.permute.xlu0 %1868
  %1872 = vset.pattern.permute.xlu0 0
  %1873 = vperm.xlu0 %1872, %v1026
  %v1874 = vpop.permute.xlu0 %1873
  %1877 = vset.pattern.permute.xlu0 0
  %1878 = vperm.xlu0 %1877, %v1028
  %v1879 = vpop.permute.xlu0 %1878
  %1882 = vset.pattern.permute.xlu0 0
  %1883 = vperm.xlu0 %1882, %v1030
  %v1884 = vpop.permute.xlu0 %1883
  %1887 = vset.pattern.permute.xlu0 0
  %1888 = vperm.xlu0 %1887, %v1032
  %v1889 = vpop.permute.xlu0 %1888
  %1892 = vset.pattern.permute.xlu0 0
  %1893 = vperm.xlu0 %1892, %v1034
  %v1894 = vpop.permute.xlu0 %1893
  %1897 = vset.pattern.permute.xlu0 0
  %1898 = vperm.xlu0 %1897, %v1036
  %v1899 = vpop.permute.xlu0 %1898
  %1902 = vset.pattern.permute.xlu0 0
  %1903 = vperm.xlu0 %1902, %v1038
  %v1904 = vpop.permute.xlu0 %1903
  %1907 = vset.pattern.permute.xlu0 0
  %1908 = vperm.xlu0 %1907, %v1040
  %v1909 = vpop.permute.xlu0 %1908
  %1912 = vset.pattern.permute.xlu0 0
  %1913 = vperm.xlu0 %1912, %v1042
  %v1914 = vpop.permute.xlu0 %1913
  %1917 = vset.pattern.permute.xlu0 0
  %1918 = vperm.xlu0 %1917, %v1044
  %v1919 = vpop.permute.xlu0 %1918
  %1922 = vset.pattern.permute.xlu0 0
  %1923 = vperm.xlu0 %1922, %v1046
  %v1924 = vpop.permute.xlu0 %1923
  %1927 = vset.pattern.permute.xlu0 0
  %1928 = vperm.xlu0 %1927, %v1048
  %v1929 = vpop.permute.xlu0 %1928
  %1932 = vset.pattern.permute.xlu0 0
  %1933 = vperm.xlu0 %1932, %v1050
  %v1934 = vpop.permute.xlu0 %1933
  %1937 = vset.pattern.permute.xlu0 0
  %1938 = vperm.xlu0 %1937, %v1052
  %v1939 = vpop.permute.xlu0 %1938
  %1942 = vset.pattern.permute.xlu0 0
  %1943 = vperm.xlu0 %1942, %v1054
  %v1944 = vpop.permute.xlu0 %1943
  %1947 = vset.pattern.permute.xlu0 0
  %1948 = vperm.xlu0 %1947, %v1056
  %v1949 = vpop.permute.xlu0 %1948
  %1952 = vset.pattern.permute.xlu0 0
  %1953 = vperm.xlu0 %1952, %v1058
  %v1954 = vpop.permute.xlu0 %1953
  %1957 = vset.pattern.permute.xlu0 0
  %1958 = vperm.xlu0 %1957, %v1060
  %v1959 = vpop.permute.xlu0 %1958
  %v1961 = vmul.f32 %v1214, %v1061
  %v1962 = vmul.f32 %v1219, %v1062
  %v1963 = vmul.f32 %v1224, %v1063
  %v1964 = vmul.f32 %v1229, %v1064
  %v1965 = vmul.f32 %v1234, %v1065
  %v1966 = vmul.f32 %v1239, %v1066
  %v1967 = vmul.f32 %v1244, %v1067
  %v1968 = vmul.f32 %v1249, %v1068
  %v1969 = vmul.f32 %v1254, %v1069
  %v1970 = vmul.f32 %v1259, %v1070
  %v1971 = vmul.f32 %v1264, %v1071
  %v1972 = vmul.f32 %v1269, %v1072
  %v1973 = vmul.f32 %v1274, %v1073
  %v1974 = vmul.f32 %v1279, %v1074
  %v1975 = vmul.f32 %v1284, %v1075
  %v1976 = vmul.f32 %v1289, %v1076
  %v1977 = vmul.f32 %v1294, %v1077
  %v1978 = vmul.f32 %v1299, %v1078
  %v1979 = vmul.f32 %v1304, %v1079
  %v1980 = vmul.f32 %v1309, %v1080
  %v1981 = vmul.f32 %v1314, %v1081
  %v1982 = vmul.f32 %v1319, %v1082
  %v1983 = vmul.f32 %v1324, %v1083
  %v1984 = vmul.f32 %v1329, %v1084
  %v1985 = vmul.f32 %v1334, %v1085
  %v1986 = vmul.f32 %v1339, %v1086
  %v1987 = vmul.f32 %v1344, %v1087
  %v1988 = vmul.f32 %v1349, %v1088
  %v1989 = vmul.f32 %v1354, %v1089
  %v1990 = vmul.f32 %v1359, %v1090
  %v1991 = vmul.f32 %v1364, %v1091
  %v1992 = vmul.f32 %v1369, %v1092
  %v1993 = vmul.f32 %v1374, %v1093
  %v1994 = vmul.f32 %v1379, %v1094
  %v1995 = vmul.f32 %v1384, %v1095
  %v1996 = vmul.f32 %v1389, %v1096
  %v1997 = vmul.f32 %v1394, %v1097
  %v1998 = vmul.f32 %v1399, %v1098
  %v1999 = vmul.f32 %v1404, %v1099
  %v2000 = vmul.f32 %v1409, %v1100
  %v2001 = vmul.f32 %v1414, %v1101
  %v2002 = vmul.f32 %v1419, %v1102
  %v2003 = vmul.f32 %v1424, %v1103
  %v2004 = vmul.f32 %v1429, %v1104
  %v2005 = vmul.f32 %v1434, %v1105
  %v2006 = vmul.f32 %v1439, %v1106
  %v2007 = vmul.f32 %v1444, %v1107
  %v2008 = vmul.f32 %v1449, %v1108
  %v2009 = vmul.f32 %v1454, %v1109
  %v2010 = vmul.f32 %v1459, %v1110
  %v2011 = vmul.f32 %v1464, %v1111
  %v2012 = vmul.f32 %v1469, %v1112
  %v2013 = vmul.f32 %v1474, %v1113
  %v2014 = vmul.f32 %v1479, %v1114
  %v2015 = vmul.f32 %v1484, %v1115
  %v2016 = vmul.f32 %v1489, %v1116
  %v2017 = vmul.f32 %v1494, %v1117
  %v2018 = vmul.f32 %v1499, %v1118
  %v2019 = vmul.f32 %v1504, %v1119
  %v2020 = vmul.f32 %v1509, %v1120
  %v2021 = vmul.f32 %v1514, %v1121
  %v2022 = vmul.f32 %v1519, %v1122
  %v2023 = vmul.f32 %v1524, %v1123
  %v2024 = vmul.f32 %v1529, %v1124
  %v2025 = vmul.f32 %v1534, %v1125
  %v2026 = vmul.f32 %v1539, %v1126
  %v2027 = vmul.f32 %v1544, %v1127
  %v2028 = vmul.f32 %v1549, %v1128
  %v2029 = vmul.f32 %v1554, %v1129
  %v2030 = vmul.f32 %v1559, %v1130
  %v2031 = vmul.f32 %v1564, %v1131
  %v2032 = vmul.f32 %v1569, %v1132
  %v2033 = vmul.f32 %v1574, %v1133
  %v2034 = vmul.f32 %v1579, %v1134
  %v2035 = vmul.f32 %v1584, %v1135
  %v2036 = vmul.f32 %v1589, %v1136
  %v2037 = vmul.f32 %v1594, %v1137
  %v2038 = vmul.f32 %v1599, %v1138
  %v2039 = vmul.f32 %v1604, %v1139
  %v2040 = vmul.f32 %v1609, %v1140
  %v2041 = vmul.f32 %v1614, %v1141
  %v2042 = vmul.f32 %v1619, %v1142
  %v2043 = vmul.f32 %v1624, %v1143
  %v2044 = vmul.f32 %v1629, %v1144
  %v2045 = vmul.f32 %v1634, %v1145
  %v2046 = vmul.f32 %v1639, %v1146
  %v2047 = vmul.f32 %v1644, %v1147
  %v2048 = vmul.f32 %v1649, %v1148
  %v2049 = vmul.f32 %v1654, %v1149
  %v2050 = vmul.f32 %v1659, %v1150
  %v2051 = vmul.f32 %v1664, %v1151
  %v2052 = vmul.f32 %v1669, %v1152
  %v2053 = vmul.f32 %v1674, %v1153
  %v2054 = vmul.f32 %v1679, %v1154
  %v2055 = vmul.f32 %v1684, %v1155
  %v2056 = vmul.f32 %v1689, %v1156
  %v2057 = vmul.f32 %v1694, %v1157
  %v2058 = vmul.f32 %v1699, %v1158
  %v2059 = vmul.f32 %v1704, %v1159
  %v2060 = vmul.f32 %v1709, %v1160
  %v2061 = vmul.f32 %v1714, %v1161
  %v2062 = vmul.f32 %v1719, %v1162
  %v2063 = vmul.f32 %v1724, %v1163
  %v2064 = vmul.f32 %v1729, %v1164
  %v2065 = vmul.f32 %v1734, %v1165
  %v2066 = vmul.f32 %v1739, %v1166
  %v2067 = vmul.f32 %v1744, %v1167
  %v2068 = vmul.f32 %v1749, %v1168
  %v2069 = vmul.f32 %v1754, %v1169
  %v2070 = vmul.f32 %v1759, %v1170
  %v2071 = vmul.f32 %v1764, %v1171
  %v2072 = vmul.f32 %v1769, %v1172
  %v2073 = vmul.f32 %v1774, %v1173
  %v2074 = vmul.f32 %v1779, %v1174
  %v2075 = vmul.f32 %v1784, %v1175
  %v2076 = vmul.f32 %v1789, %v1176
  %v2077 = vmul.f32 %v1794, %v1177
  %v2078 = vmul.f32 %v1799, %v1178
  %v2079 = vmul.f32 %v1804, %v1179
  %v2080 = vmul.f32 %v1809, %v1180
  %v2081 = vmul.f32 %v1814, %v1181
  %v2082 = vmul.f32 %v1819, %v1182
  %v2083 = vmul.f32 %v1824, %v1183
  %v2084 = vmul.f32 %v1829, %v1184
  %v2085 = vmul.f32 %v1834, %v1185
  %v2086 = vmul.f32 %v1839, %v1186
  %v2087 = vmul.f32 %v1844, %v1187
  %v2088 = vmul.f32 %v1849, %v1188
  %v2089 = vmul.f32 %v1854, %v1189
  %v2090 = vmul.f32 %v1859, %v1190
  %v2091 = vmul.f32 %v1864, %v1191
  %v2092 = vmul.f32 %v1869, %v1192
  %v2093 = vmul.f32 %v1874, %v1193
  %v2094 = vmul.f32 %v1879, %v1194
  %v2095 = vmul.f32 %v1884, %v1195
  %v2096 = vmul.f32 %v1889, %v1196
  %v2097 = vmul.f32 %v1894, %v1197
  %v2098 = vmul.f32 %v1899, %v1198
  %v2099 = vmul.f32 %v1904, %v1199
  %v2100 = vmul.f32 %v1909, %v1200
  %v2101 = vmul.f32 %v1914, %v1201
  %v2102 = vmul.f32 %v1919, %v1202
  %v2103 = vmul.f32 %v1924, %v1203
  %v2104 = vmul.f32 %v1929, %v1204
  %v2105 = vmul.f32 %v1934, %v1205
  %v2106 = vmul.f32 %v1939, %v1206
  %v2107 = vmul.f32 %v1944, %v1207
  %v2108 = vmul.f32 %v1949, %v1208
  %v2109 = vmul.f32 %v1954, %v1209
  %v2110 = vmul.f32 %v1959, %v1210
  %vm2111 = vcmask 400384
  %2112 = vst.msk [vmem:[%s2] sm:$0xff] %vm2111, %v1961
  %2113 = vst.msk [vmem:[%s2 + $0x8] sm:$0xff] %vm2111, %v1962
  %2114 = vst.msk [vmem:[%s2 + $0x10] sm:$0xff] %vm2111, %v1963
  %2115 = vst.msk [vmem:[%s2 + $0x18] sm:$0xff] %vm2111, %v1964
  %2116 = vst.msk [vmem:[%s2 + $0x20] sm:$0xff] %vm2111, %v1965
  %2117 = vst.msk [vmem:[%s2 + $0x28] sm:$0xff] %vm2111, %v1966
  %2118 = vst.msk [vmem:[%s2 + $0x30] sm:$0xff] %vm2111, %v1967
  %2119 = vst.msk [vmem:[%s2 + $0x38] sm:$0xff] %vm2111, %v1968
  %2120 = vst.msk [vmem:[%s2 + $0x40] sm:$0xff] %vm2111, %v1969
  %2121 = vst.msk [vmem:[%s2 + $0x48] sm:$0xff] %vm2111, %v1970
  %2122 = vst.msk [vmem:[%s2 + $0x50] sm:$0xff] %vm2111, %v1971
  %2123 = vst.msk [vmem:[%s2 + $0x58] sm:$0xff] %vm2111, %v1972
  %2124 = vst.msk [vmem:[%s2 + $0x60] sm:$0xff] %vm2111, %v1973
  %2125 = vst.msk [vmem:[%s2 + $0x68] sm:$0xff] %vm2111, %v1974
  %2126 = vst.msk [vmem:[%s2 + $0x70] sm:$0xff] %vm2111, %v1975
  %2127 = vst.msk [vmem:[%s2 + $0x78] sm:$0xff] %vm2111, %v1976
  %2128 = vst.msk [vmem:[%s2 + $0x80] sm:$0xff] %vm2111, %v1977
  %2129 = vst.msk [vmem:[%s2 + $0x88] sm:$0xff] %vm2111, %v1978
  %2130 = vst.msk [vmem:[%s2 + $0x90] sm:$0xff] %vm2111, %v1979
  %2131 = vst.msk [vmem:[%s2 + $0x98] sm:$0xff] %vm2111, %v1980
  %2132 = vst.msk [vmem:[%s2 + $0xa0] sm:$0xff] %vm2111, %v1981
  %2133 = vst.msk [vmem:[%s2 + $0xa8] sm:$0xff] %vm2111, %v1982
  %2134 = vst.msk [vmem:[%s2 + $0xb0] sm:$0xff] %vm2111, %v1983
  %2135 = vst.msk [vmem:[%s2 + $0xb8] sm:$0xff] %vm2111, %v1984
  %2136 = vst.msk [vmem:[%s2 + $0xc0] sm:$0xff] %vm2111, %v1985
  %2137 = vst.msk [vmem:[%s2 + $0xc8] sm:$0xff] %vm2111, %v1986
  %2138 = vst.msk [vmem:[%s2 + $0xd0] sm:$0xff] %vm2111, %v1987
  %2139 = vst.msk [vmem:[%s2 + $0xd8] sm:$0xff] %vm2111, %v1988
  %2140 = vst.msk [vmem:[%s2 + $0xe0] sm:$0xff] %vm2111, %v1989
  %2141 = vst.msk [vmem:[%s2 + $0xe8] sm:$0xff] %vm2111, %v1990
  %2142 = vst.msk [vmem:[%s2 + $0xf0] sm:$0xff] %vm2111, %v1991
  %2143 = vst.msk [vmem:[%s2 + $0xf8] sm:$0xff] %vm2111, %v1992
  %2144 = vst.msk [vmem:[%s2 + $0x100] sm:$0xff] %vm2111, %v1993
  %2145 = vst.msk [vmem:[%s2 + $0x108] sm:$0xff] %vm2111, %v1994
  %2146 = vst.msk [vmem:[%s2 + $0x110] sm:$0xff] %vm2111, %v1995
  %2147 = vst.msk [vmem:[%s2 + $0x118] sm:$0xff] %vm2111, %v1996
  %2148 = vst.msk [vmem:[%s2 + $0x120] sm:$0xff] %vm2111, %v1997
  %2149 = vst.msk [vmem:[%s2 + $0x128] sm:$0xff] %vm2111, %v1998
  %2150 = vst.msk [vmem:[%s2 + $0x130] sm:$0xff] %vm2111, %v1999
  %2151 = vst.msk [vmem:[%s2 + $0x138] sm:$0xff] %vm2111, %v2000
  %2152 = vst.msk [vmem:[%s2 + $0x140] sm:$0xff] %vm2111, %v2001
  %2153 = vst.msk [vmem:[%s2 + $0x148] sm:$0xff] %vm2111, %v2002
  %2154 = vst.msk [vmem:[%s2 + $0x150] sm:$0xff] %vm2111, %v2003
  %2155 = vst.msk [vmem:[%s2 + $0x158] sm:$0xff] %vm2111, %v2004
  %2156 = vst.msk [vmem:[%s2 + $0x160] sm:$0xff] %vm2111, %v2005
  %2157 = vst.msk [vmem:[%s2 + $0x168] sm:$0xff] %vm2111, %v2006
  %2158 = vst.msk [vmem:[%s2 + $0x170] sm:$0xff] %vm2111, %v2007
  %2159 = vst.msk [vmem:[%s2 + $0x178] sm:$0xff] %vm2111, %v2008
  %2160 = vst.msk [vmem:[%s2 + $0x180] sm:$0xff] %vm2111, %v2009
  %2161 = vst.msk [vmem:[%s2 + $0x188] sm:$0xff] %vm2111, %v2010
  %2162 = vst.msk [vmem:[%s2 + $0x190] sm:$0xff] %vm2111, %v2011
  %2163 = vst.msk [vmem:[%s2 + $0x198] sm:$0xff] %vm2111, %v2012
  %2164 = vst.msk [vmem:[%s2 + $0x1a0] sm:$0xff] %vm2111, %v2013
  %2165 = vst.msk [vmem:[%s2 + $0x1a8] sm:$0xff] %vm2111, %v2014
  %2166 = vst.msk [vmem:[%s2 + $0x1b0] sm:$0xff] %vm2111, %v2015
  %2167 = vst.msk [vmem:[%s2 + $0x1b8] sm:$0xff] %vm2111, %v2016
  %2168 = vst.msk [vmem:[%s2 + $0x1c0] sm:$0xff] %vm2111, %v2017
  %2169 = vst.msk [vmem:[%s2 + $0x1c8] sm:$0xff] %vm2111, %v2018
  %2170 = vst.msk [vmem:[%s2 + $0x1d0] sm:$0xff] %vm2111, %v2019
  %2171 = vst.msk [vmem:[%s2 + $0x1d8] sm:$0xff] %vm2111, %v2020
  %2172 = vst.msk [vmem:[%s2 + $0x1e0] sm:$0xff] %vm2111, %v2021
  %2173 = vst.msk [vmem:[%s2 + $0x1e8] sm:$0xff] %vm2111, %v2022
  %2174 = vst.msk [vmem:[%s2 + $0x1f0] sm:$0xff] %vm2111, %v2023
  %2175 = vst.msk [vmem:[%s2 + $0x1f8] sm:$0xff] %vm2111, %v2024
  %2176 = vst.msk [vmem:[%s2 + $0x200] sm:$0xff] %vm2111, %v2025
  %2177 = vst.msk [vmem:[%s2 + $0x208] sm:$0xff] %vm2111, %v2026
  %2178 = vst.msk [vmem:[%s2 + $0x210] sm:$0xff] %vm2111, %v2027
  %2179 = vst.msk [vmem:[%s2 + $0x218] sm:$0xff] %vm2111, %v2028
  %2180 = vst.msk [vmem:[%s2 + $0x220] sm:$0xff] %vm2111, %v2029
  %2181 = vst.msk [vmem:[%s2 + $0x228] sm:$0xff] %vm2111, %v2030
  %2182 = vst.msk [vmem:[%s2 + $0x230] sm:$0xff] %vm2111, %v2031
  %2183 = vst.msk [vmem:[%s2 + $0x238] sm:$0xff] %vm2111, %v2032
  %2184 = vst.msk [vmem:[%s2 + $0x240] sm:$0xff] %vm2111, %v2033
  %2185 = vst.msk [vmem:[%s2 + $0x248] sm:$0xff] %vm2111, %v2034
  %2186 = vst.msk [vmem:[%s2 + $0x250] sm:$0xff] %vm2111, %v2035
  %2187 = vst.msk [vmem:[%s2 + $0x258] sm:$0xff] %vm2111, %v2036
  %2188 = vst.msk [vmem:[%s2 + $0x260] sm:$0xff] %vm2111, %v2037
  %2189 = vst.msk [vmem:[%s2 + $0x268] sm:$0xff] %vm2111, %v2038
  %2190 = vst.msk [vmem:[%s2 + $0x270] sm:$0xff] %vm2111, %v2039
  %2191 = vst.msk [vmem:[%s2 + $0x278] sm:$0xff] %vm2111, %v2040
  %2192 = vst.msk [vmem:[%s2 + $0x280] sm:$0xff] %vm2111, %v2041
  %2193 = vst.msk [vmem:[%s2 + $0x288] sm:$0xff] %vm2111, %v2042
  %2194 = vst.msk [vmem:[%s2 + $0x290] sm:$0xff] %vm2111, %v2043
  %2195 = vst.msk [vmem:[%s2 + $0x298] sm:$0xff] %vm2111, %v2044
  %2196 = vst.msk [vmem:[%s2 + $0x2a0] sm:$0xff] %vm2111, %v2045
  %2197 = vst.msk [vmem:[%s2 + $0x2a8] sm:$0xff] %vm2111, %v2046
  %2198 = vst.msk [vmem:[%s2 + $0x2b0] sm:$0xff] %vm2111, %v2047
  %2199 = vst.msk [vmem:[%s2 + $0x2b8] sm:$0xff] %vm2111, %v2048
  %2200 = vst.msk [vmem:[%s2 + $0x2c0] sm:$0xff] %vm2111, %v2049
  %2201 = vst.msk [vmem:[%s2 + $0x2c8] sm:$0xff] %vm2111, %v2050
  %2202 = vst.msk [vmem:[%s2 + $0x2d0] sm:$0xff] %vm2111, %v2051
  %2203 = vst.msk [vmem:[%s2 + $0x2d8] sm:$0xff] %vm2111, %v2052
  %2204 = vst.msk [vmem:[%s2 + $0x2e0] sm:$0xff] %vm2111, %v2053
  %2205 = vst.msk [vmem:[%s2 + $0x2e8] sm:$0xff] %vm2111, %v2054
  %2206 = vst.msk [vmem:[%s2 + $0x2f0] sm:$0xff] %vm2111, %v2055
  %2207 = vst.msk [vmem:[%s2 + $0x2f8] sm:$0xff] %vm2111, %v2056
  %2208 = vst.msk [vmem:[%s2 + $0x300] sm:$0xff] %vm2111, %v2057
  %2209 = vst.msk [vmem:[%s2 + $0x308] sm:$0xff] %vm2111, %v2058
  %2210 = vst.msk [vmem:[%s2 + $0x310] sm:$0xff] %vm2111, %v2059
  %2211 = vst.msk [vmem:[%s2 + $0x318] sm:$0xff] %vm2111, %v2060
  %2212 = vst.msk [vmem:[%s2 + $0x320] sm:$0xff] %vm2111, %v2061
  %2213 = vst.msk [vmem:[%s2 + $0x328] sm:$0xff] %vm2111, %v2062
  %2214 = vst.msk [vmem:[%s2 + $0x330] sm:$0xff] %vm2111, %v2063
  %2215 = vst.msk [vmem:[%s2 + $0x338] sm:$0xff] %vm2111, %v2064
  %2216 = vst.msk [vmem:[%s2 + $0x340] sm:$0xff] %vm2111, %v2065
  %2217 = vst.msk [vmem:[%s2 + $0x348] sm:$0xff] %vm2111, %v2066
  %2218 = vst.msk [vmem:[%s2 + $0x350] sm:$0xff] %vm2111, %v2067
  %2219 = vst.msk [vmem:[%s2 + $0x358] sm:$0xff] %vm2111, %v2068
  %2220 = vst.msk [vmem:[%s2 + $0x360] sm:$0xff] %vm2111, %v2069
  %2221 = vst.msk [vmem:[%s2 + $0x368] sm:$0xff] %vm2111, %v2070
  %2222 = vst.msk [vmem:[%s2 + $0x370] sm:$0xff] %vm2111, %v2071
  %2223 = vst.msk [vmem:[%s2 + $0x378] sm:$0xff] %vm2111, %v2072
  %2224 = vst.msk [vmem:[%s2 + $0x380] sm:$0xff] %vm2111, %v2073
  %2225 = vst.msk [vmem:[%s2 + $0x388] sm:$0xff] %vm2111, %v2074
  %2226 = vst.msk [vmem:[%s2 + $0x390] sm:$0xff] %vm2111, %v2075
  %2227 = vst.msk [vmem:[%s2 + $0x398] sm:$0xff] %vm2111, %v2076
  %2228 = vst.msk [vmem:[%s2 + $0x3a0] sm:$0xff] %vm2111, %v2077
  %2229 = vst.msk [vmem:[%s2 + $0x3a8] sm:$0xff] %vm2111, %v2078
  %2230 = vst.msk [vmem:[%s2 + $0x3b0] sm:$0xff] %vm2111, %v2079
  %2231 = vst.msk [vmem:[%s2 + $0x3b8] sm:$0xff] %vm2111, %v2080
  %2232 = vst.msk [vmem:[%s2 + $0x3c0] sm:$0xff] %vm2111, %v2081
  %2233 = vst.msk [vmem:[%s2 + $0x3c8] sm:$0xff] %vm2111, %v2082
  %2234 = vst.msk [vmem:[%s2 + $0x3d0] sm:$0xff] %vm2111, %v2083
  %2235 = vst.msk [vmem:[%s2 + $0x3d8] sm:$0xff] %vm2111, %v2084
  %2236 = vst.msk [vmem:[%s2 + $0x3e0] sm:$0xff] %vm2111, %v2085
  %2237 = vst.msk [vmem:[%s2 + $0x3e8] sm:$0xff] %vm2111, %v2086
  %2238 = vst.msk [vmem:[%s2 + $0x3f0] sm:$0xff] %vm2111, %v2087
  %2239 = vst.msk [vmem:[%s2 + $0x3f8] sm:$0xff] %vm2111, %v2088
  %2240 = vst.msk [vmem:[%s2 + $0x400] sm:$0xff] %vm2111, %v2089
  %2241 = vst.msk [vmem:[%s2 + $0x408] sm:$0xff] %vm2111, %v2090
  %2242 = vst.msk [vmem:[%s2 + $0x410] sm:$0xff] %vm2111, %v2091
  %2243 = vst.msk [vmem:[%s2 + $0x418] sm:$0xff] %vm2111, %v2092
  %2244 = vst.msk [vmem:[%s2 + $0x420] sm:$0xff] %vm2111, %v2093
  %2245 = vst.msk [vmem:[%s2 + $0x428] sm:$0xff] %vm2111, %v2094
  %2246 = vst.msk [vmem:[%s2 + $0x430] sm:$0xff] %vm2111, %v2095
  %2247 = vst.msk [vmem:[%s2 + $0x438] sm:$0xff] %vm2111, %v2096
  %2248 = vst.msk [vmem:[%s2 + $0x440] sm:$0xff] %vm2111, %v2097
  %2249 = vst.msk [vmem:[%s2 + $0x448] sm:$0xff] %vm2111, %v2098
  %2250 = vst.msk [vmem:[%s2 + $0x450] sm:$0xff] %vm2111, %v2099
  %2251 = vst.msk [vmem:[%s2 + $0x458] sm:$0xff] %vm2111, %v2100
  %2252 = vst.msk [vmem:[%s2 + $0x460] sm:$0xff] %vm2111, %v2101
  %2253 = vst.msk [vmem:[%s2 + $0x468] sm:$0xff] %vm2111, %v2102
  %2254 = vst.msk [vmem:[%s2 + $0x470] sm:$0xff] %vm2111, %v2103
  %2255 = vst.msk [vmem:[%s2 + $0x478] sm:$0xff] %vm2111, %v2104
  %2256 = vst.msk [vmem:[%s2 + $0x480] sm:$0xff] %vm2111, %v2105
  %2257 = vst.msk [vmem:[%s2 + $0x488] sm:$0xff] %vm2111, %v2106
  %2258 = vst.msk [vmem:[%s2 + $0x490] sm:$0xff] %vm2111, %v2107
  %2259 = vst.msk [vmem:[%s2 + $0x498] sm:$0xff] %vm2111, %v2108
  %2260 = vst.msk [vmem:[%s2 + $0x4a0] sm:$0xff] %vm2111, %v2109
  %2261 = vst.msk [vmem:[%s2 + $0x4a8] sm:$0xff] %vm2111, %v2110
  // Predicated region
  $region10: #{tpu_custom_call.1} parent=0 // pred_check
    _
  $region11: #{tpu_custom_call.1} parent=0 // pred_check_branch
    %2263 = sbr.rel (0) target = $region13
  $region12: #{tpu_custom_call.1} parent=0 // pred_region
    _
  $region13: #{tpu_custom_call.1} parent=0 // pred_fallthru
    _
  // Predicated region
  $region14: #{tpu_custom_call.1} parent=0 // pred_check
    _
  $region15: #{tpu_custom_call.1} parent=0 // pred_check_branch
    %2265 = sbr.rel (0) target = $region17
  $region16: #{tpu_custom_call.1} parent=0 // pred_region
    _
  $region17: #{tpu_custom_call.1} parent=0 // pred_fallthru
    _

</llo_original>
